<compile_context>
chip_gen: v7x
topology: tpu7x:2x2x1
jax: 0.10.0
libtpu: 0.0.40
codegen_flags: <defaults>
</compile_context>

<pallas_src>
import functools

import jax
import jax.numpy as jnp
from jax.experimental import pallas as pl
from jax.experimental.pallas import tpu as pltpu


def _round_up(x, m):
    return ((x + m - 1) // m) * m


# Per-step VMEM budget for the batch tiles.  12 MiB fits every generation's
# *default* scoped-VMEM limit (v5e 16 MiB, v6e/v7x 32 MiB) with headroom for
# weights and compiler scratch.
_VMEM_TILE_BUDGET = 12 << 20
# f32 bytes of VMEM per batch row: 5 I/O tiles double-buffered (40*D) plus
# ~6 f32 intermediates (h, a1, a2, d/s1, matmul casts) (24*D).
_BYTES_PER_ROW_PER_D = 64


def attention_set_kernel(e1_ref, e1o_ref, e2_ref, e2o_ref,
                         w1a_ref, w1b_ref, w2_ref, out_ref,
                         *, inv_tem, mm_dtype):
    """Fused: 2x Attention MLP -> 2-way elementwise softmax -> center mix."""
    w1a = w1a_ref[...]          # atten_mats1[:D]  (pre-cast in wrapper)
    w1b = w1b_ref[...]          # atten_mats1[D:]
    w2 = w2_ref[...]            # atten_mats2

    e1 = e1_ref[...]
    e2 = e2_ref[...]

    def att(c, o):
        # cat([c, o], dim=1) @ W1 == c @ W1[:D] + o @ W1[D:]
        h = jnp.maximum(
            jnp.dot(c.astype(mm_dtype), w1a, preferred_element_type=jnp.float32)
            + jnp.dot(o.astype(mm_dtype), w1b, preferred_element_type=jnp.float32),
            0.0)                                                   # relu
        return jnp.dot(h.astype(mm_dtype), w2, preferred_element_type=jnp.float32)

    a1 = att(e1, e1o_ref[...])
    a2 = att(e2, e2o_ref[...])

    # 2-branch elementwise softmax via the sigmoid identity:
    #   softmax([t1, t2])[0] = 1 / (1 + exp(t2 - t1)).
    # att_reg cancels EXACTLY here only because BOTH branches receive the same
    # additive shift (softmax is shift-invariant); a per-branch regularizer
    # would invalidate this.  Clamp is one-sided on purpose: exp of a large
    # negative underflows to 0 (fine); exp(80) is finite in f32.
    d = jnp.minimum((a2 - a1) * inv_tem, 80.0)
    s1 = 1.0 / (1.0 + jnp.exp(d))       # exact divide (approx rcp broke tol)
    s2 = 1.0 - s1

    out_ref[...] = (e1.astype(jnp.float32) * s1
                    + e2.astype(jnp.float32) * s2).astype(out_ref.dtype)
    # TODO(synk): optional 3-branch path (embeds3 non-empty) would add a third
    # attention call and a 3-way elementwise softmax.


def attention_set(e1, e1o, e2, e2o, w1, w2, att_reg=0.0, att_tem=1.0,
                  tile_b=None, use_bf16=True, out_dtype=None):
    B, D = e1.shape
    assert w1.shape == (2 * D, D) and w2.shape == (D, D)
    assert D % 128 == 0, "D must be a multiple of 128 (lane-dense); pad in caller"
    # att_reg is an identical additive shift on both branches -> cancels exactly
    # in the softmax.  Only the temperature scale survives.
    del att_reg
    inv_tem = 1.0 / (float(att_tem) + 0.0001)

    mm_dtype = jnp.bfloat16 if use_bf16 else jnp.float32
    out_dtype = e1.dtype if out_dtype is None else out_dtype

    # Pre-split + pre-cast the weights ONCE in the wrapper (no per-step casts,
    # half the weight DMA bytes / VMEM residency on the bf16 path).
    w1a = w1[:D].astype(mm_dtype)
    w1b = w1[D:].astype(mm_dtype)
    w2c = w2.astype(mm_dtype)

    mult = 16 if use_bf16 else 8        # bf16 packs 2 rows / sublane
    if tile_b is None:
        # Big tiles amortize the ~0.35us/step overhead, but: (a) stay inside the
        # VMEM budget, (b) keep >= ~8 grid steps so the parallel batch axis can
        # shard across v7x's 2 TensorCores and the pipeline can overlap DMA.
        cap_vmem = max(mult, (_VMEM_TILE_BUDGET // (_BYTES_PER_ROW_PER_D * D))
                       // mult * mult)
        cap_grid = max(mult, _round_up(pl.cdiv(B, 8), mult))
        tile_b = max(mult, min(512, cap_vmem, cap_grid))
    assert tile_b % mult == 0, f"tile_b must be a multiple of {mult}"

    # No jnp.pad: partial tail block is masked by Pallas (row-wise math only).
    grid = (pl.cdiv(B, tile_b),)

    data_spec = pl.BlockSpec((tile_b, D), lambda i: (i, 0))
    w_spec = pl.BlockSpec((D, D), lambda i: (0, 0))   # resident across the grid

    w_itemsize = 2 if use_bf16 else 4
    w_bytes = 3 * D * D * w_itemsize
    est_vmem = _BYTES_PER_ROW_PER_D * tile_b * D + 2 * w_bytes + (2 << 20)
    # >= 32 MiB is safe on every generation (v5e/v6e 128 MiB phys, v7x 64 MiB);
    # cap at 48 MiB to stay inside v7x physical VMEM with margin.
    vmem_limit = int(min(48 << 20, max(32 << 20, int(est_vmem * 1.25))))

    io_itemsize = e1.dtype.itemsize
    cost = pl.CostEstimate(
        flops=int(12 * B * D * D),
        transcendentals=int(B * D),
        bytes_accessed=int(io_itemsize * 5 * B * D + w_bytes))

    kernel = functools.partial(attention_set_kernel,
                               inv_tem=inv_tem, mm_dtype=mm_dtype)

    return pl.pallas_call(
        kernel,
        out_shape=jax.ShapeDtypeStruct((B, D), out_dtype),
        grid=grid,
        in_specs=[data_spec, data_spec, data_spec, data_spec,
                  w_spec, w_spec, w_spec],
        out_specs=data_spec,
        compiler_params=pltpu.CompilerParams(
            dimension_semantics=("parallel",),
            vmem_limit_bytes=vmem_limit),
        cost_estimate=cost,
    )(e1, e1o, e2, e2o, w1a, w1b, w2c)


def _xavier_uniform(key, shape):
    fan_in, fan_out = shape
    bound = (6.0 / (fan_in + fan_out)) ** 0.5
    return jax.random.uniform(key, shape, jnp.float32, -bound, bound)


def _reference(e1, e1o, e2, e2o, w1, w2, att_reg=0.0, att_tem=1.0):
    hp = jax.lax.Precision.HIGHEST

    def att(c, o):
        t1 = jnp.concatenate([c, o], axis=1)
        t2 = jnp.maximum(jnp.dot(t1, w1, precision=hp), 0.0)
        return jnp.dot(t2, w2, precision=hp)

    t1 = (att(e1, e1o) + att_reg) / (att_tem + 0.0001)
    t2 = (att(e2, e2o) + att_reg) / (att_tem + 0.0001)
    combined = jax.nn.softmax(jnp.stack([t1, t2]), axis=0)
    return e1 * combined[0] + e2 * combined[1]


if __name__ == "__main__":
    # mode_dims == expand_dims == D; D lane-dense (128), small batch.
    B, D = 256, 128
    key = jax.random.PRNGKey(0)
    k = jax.random.split(key, 6)
    e1 = jax.random.normal(k[0], (B, D), jnp.float32)
    e1o = jax.random.normal(k[1], (B, D), jnp.float32)
    e2 = jax.random.normal(k[2], (B, D), jnp.float32)
    e2o = jax.random.normal(k[3], (B, D), jnp.float32)
    w1 = _xavier_uniform(k[4], (2 * D, D))   # atten_mats1
    w2 = _xavier_uniform(k[5], (D, D))       # atten_mats2

    att_reg, att_tem = 0.3, 2.0
    ref = _reference(e1, e1o, e2, e2o, w1, w2, att_reg, att_tem)

    # 1) f32-matmul path, explicit small tile -> 4-step grid.
    out_f32 = attention_set(e1, e1o, e2, e2o, w1, w2, att_reg, att_tem,
                            tile_b=64, use_bf16=False)
    out_f32 = jax.block_until_ready(out_f32)
    assert jnp.allclose(out_f32, ref, atol=1e-2, rtol=1e-2), "f32 mismatch"

    # 2) Default fast path: bf16 matmuls, auto tile (8-step grid here).
    out_bf16 = attention_set(e1, e1o, e2, e2o, w1, w2, att_reg, att_tem)
    out_bf16 = jax.block_until_ready(out_bf16)
    assert jnp.allclose(out_bf16, ref, atol=5e-2, rtol=5e-2), "bf16 mismatch"

    # 3) Ragged batch (B not a multiple of tile_b) -> masked tail block, no pad.
    Br = 200
    refr = _reference(e1[:Br], e1o[:Br], e2[:Br], e2o[:Br], w1, w2,
                      att_reg, att_tem)
    out_r = attention_set(e1[:Br], e1o[:Br], e2[:Br], e2o[:Br], w1, w2,
                          att_reg, att_tem)
    out_r = jax.block_until_ready(out_r)
    assert out_r.shape == (Br, D)
    assert jnp.allclose(out_r, refr, atol=5e-2, rtol=5e-2), "ragged mismatch"

    print("KERNEL_OK")
</pallas_src>

<mosaic_0001>
module attributes {stable_mosaic.version = 11 : i64} {
  func.func @attention_set_kernel(%arg0: i32, %arg1: memref<64x128xf32, #tpu.memory_space<vmem>>, %arg2: memref<64x128xf32, #tpu.memory_space<vmem>>, %arg3: memref<64x128xf32, #tpu.memory_space<vmem>>, %arg4: memref<64x128xf32, #tpu.memory_space<vmem>>, %arg5: memref<128x128xf32, #tpu.memory_space<vmem>>, %arg6: memref<128x128xf32, #tpu.memory_space<vmem>>, %arg7: memref<128x128xf32, #tpu.memory_space<vmem>>, %arg8: memref<64x128xf32, #tpu.memory_space<vmem>>) attributes {dimension_semantics = [#tpu.dimension_semantics<parallel>], iteration_bounds = array<i64: 4>, scalar_prefetch = 0 : i64, scratch_operands = 0 : i64, tpu.core_type = #tpu.core_type<tc>, window_params = [{transform_indices = @transform_0, window_bounds = array<i64: 64, 128>}, {transform_indices = @transform_1, window_bounds = array<i64: 64, 128>}, {transform_indices = @transform_2, window_bounds = array<i64: 64, 128>}, {transform_indices = @transform_3, window_bounds = array<i64: 64, 128>}, {pipeline_mode = #tpu.pipeline_mode<synchronous>, transform_indices = @transform_4, window_bounds = array<i64: 128, 128>}, {pipeline_mode = #tpu.pipeline_mode<synchronous>, transform_indices = @transform_5, window_bounds = array<i64: 128, 128>}, {pipeline_mode = #tpu.pipeline_mode<synchronous>, transform_indices = @transform_6, window_bounds = array<i64: 128, 128>}, {transform_indices = @transform_7, window_bounds = array<i64: 64, 128>}]} {
    %c0 = arith.constant 0 : index
    %c0_0 = arith.constant 0 : index
    %0 = vector.load %arg5[%c0, %c0_0] : memref<128x128xf32, #tpu.memory_space<vmem>>, vector<128x128xf32>
    %c0_1 = arith.constant 0 : index
    %c0_2 = arith.constant 0 : index
    %1 = vector.load %arg6[%c0_1, %c0_2] : memref<128x128xf32, #tpu.memory_space<vmem>>, vector<128x128xf32>
    %c0_3 = arith.constant 0 : index
    %c0_4 = arith.constant 0 : index
    %2 = vector.load %arg7[%c0_3, %c0_4] : memref<128x128xf32, #tpu.memory_space<vmem>>, vector<128x128xf32>
    %c0_5 = arith.constant 0 : index
    %c0_6 = arith.constant 0 : index
    %3 = vector.load %arg1[%c0_5, %c0_6] : memref<64x128xf32, #tpu.memory_space<vmem>>, vector<64x128xf32>
    %c0_7 = arith.constant 0 : index
    %c0_8 = arith.constant 0 : index
    %4 = vector.load %arg3[%c0_7, %c0_8] : memref<64x128xf32, #tpu.memory_space<vmem>>, vector<64x128xf32>
    %c0_9 = arith.constant 0 : index
    %c0_10 = arith.constant 0 : index
    %5 = vector.load %arg2[%c0_9, %c0_10] : memref<64x128xf32, #tpu.memory_space<vmem>>, vector<64x128xf32>
    %cst = arith.constant dense<0.000000e+00> : vector<64x128xf32>
    %6 = tpu.matmul %3, %0, %cst {dimension_numbers = #tpu.dot_dimension_numbers<[1], [0], [0], [1], [0, 0, 1, 1], [], []>} : vector<64x128xf32>, vector<128x128xf32>, vector<64x128xf32> -> vector<64x128xf32>
    %cst_11 = arith.constant dense<0.000000e+00> : vector<64x128xf32>
    %7 = tpu.matmul %5, %1, %cst_11 {dimension_numbers = #tpu.dot_dimension_numbers<[1], [0], [0], [1], [0, 0, 1, 1], [], []>} : vector<64x128xf32>, vector<128x128xf32>, vector<64x128xf32> -> vector<64x128xf32>
    %8 = arith.addf %6, %7 : vector<64x128xf32>
    %cst_12 = arith.constant 0.000000e+00 : f32
    %9 = vector.broadcast %cst_12 : f32 to vector<64x128xf32>
    %10 = arith.maximumf %8, %9 : vector<64x128xf32>
    %cst_13 = arith.constant dense<0.000000e+00> : vector<64x128xf32>
    %11 = tpu.matmul %10, %2, %cst_13 {dimension_numbers = #tpu.dot_dimension_numbers<[1], [0], [0], [1], [0, 0, 1, 1], [], []>} : vector<64x128xf32>, vector<128x128xf32>, vector<64x128xf32> -> vector<64x128xf32>
    %c0_14 = arith.constant 0 : index
    %c0_15 = arith.constant 0 : index
    %12 = vector.load %arg4[%c0_14, %c0_15] : memref<64x128xf32, #tpu.memory_space<vmem>>, vector<64x128xf32>
    %cst_16 = arith.constant dense<0.000000e+00> : vector<64x128xf32>
    %13 = tpu.matmul %4, %0, %cst_16 {dimension_numbers = #tpu.dot_dimension_numbers<[1], [0], [0], [1], [0, 0, 1, 1], [], []>} : vector<64x128xf32>, vector<128x128xf32>, vector<64x128xf32> -> vector<64x128xf32>
    %cst_17 = arith.constant dense<0.000000e+00> : vector<64x128xf32>
    %14 = tpu.matmul %12, %1, %cst_17 {dimension_numbers = #tpu.dot_dimension_numbers<[1], [0], [0], [1], [0, 0, 1, 1], [], []>} : vector<64x128xf32>, vector<128x128xf32>, vector<64x128xf32> -> vector<64x128xf32>
    %15 = arith.addf %13, %14 : vector<64x128xf32>
    %cst_18 = arith.constant 0.000000e+00 : f32
    %16 = vector.broadcast %cst_18 : f32 to vector<64x128xf32>
    %17 = arith.maximumf %15, %16 : vector<64x128xf32>
    %cst_19 = arith.constant dense<0.000000e+00> : vector<64x128xf32>
    %18 = tpu.matmul %17, %2, %cst_19 {dimension_numbers = #tpu.dot_dimension_numbers<[1], [0], [0], [1], [0, 0, 1, 1], [], []>} : vector<64x128xf32>, vector<128x128xf32>, vector<64x128xf32> -> vector<64x128xf32>
    %19 = arith.subf %18, %11 : vector<64x128xf32>
    %cst_20 = arith.constant 4.999750e-01 : f32
    %20 = vector.broadcast %cst_20 : f32 to vector<64x128xf32>
    %21 = arith.mulf %19, %20 : vector<64x128xf32>
    %cst_21 = arith.constant 8.000000e+01 : f32
    %22 = vector.broadcast %cst_21 : f32 to vector<64x128xf32>
    %23 = arith.minimumf %21, %22 : vector<64x128xf32>
    %24 = math.exp %23 : vector<64x128xf32>
    %cst_22 = arith.constant 1.000000e+00 : f32
    %25 = vector.broadcast %cst_22 : f32 to vector<64x128xf32>
    %26 = arith.addf %25, %24 : vector<64x128xf32>
    %cst_23 = arith.constant 1.000000e+00 : f32
    %27 = vector.broadcast %cst_23 : f32 to vector<64x128xf32>
    %28 = arith.divf %27, %26 : vector<64x128xf32>
    %cst_24 = arith.constant 1.000000e+00 : f32
    %29 = vector.broadcast %cst_24 : f32 to vector<64x128xf32>
    %30 = arith.subf %29, %28 : vector<64x128xf32>
    %31 = arith.mulf %3, %28 : vector<64x128xf32>
    %32 = arith.mulf %4, %30 : vector<64x128xf32>
    %33 = arith.addf %31, %32 : vector<64x128xf32>
    %c0_25 = arith.constant 0 : index
    %c0_26 = arith.constant 0 : index
    %34 = vector.load %arg8[%c0_25, %c0_26] : memref<64x128xf32, #tpu.memory_space<vmem>>, vector<64x128xf32>
    tpu.vector_store %arg8[%c0_25, %c0_26], %33 {strides = array<i32>} : memref<64x128xf32, #tpu.memory_space<vmem>>, vector<64x128xf32>,
    return
  }
  func.func @transform_0(%arg0: i32) -> (i32, i32) {
    %c0_i32 = arith.constant 0 : i32
    %c0_i32_0 = arith.constant 0 : i32
    return %arg0, %c0_i32 : i32, i32
  }
  func.func @transform_1(%arg0: i32) -> (i32, i32) {
    %c0_i32 = arith.constant 0 : i32
    %c0_i32_0 = arith.constant 0 : i32
    return %arg0, %c0_i32 : i32, i32
  }
  func.func @transform_2(%arg0: i32) -> (i32, i32) {
    %c0_i32 = arith.constant 0 : i32
    %c0_i32_0 = arith.constant 0 : i32
    return %arg0, %c0_i32 : i32, i32
  }
  func.func @transform_3(%arg0: i32) -> (i32, i32) {
    %c0_i32 = arith.constant 0 : i32
    %c0_i32_0 = arith.constant 0 : i32
    return %arg0, %c0_i32 : i32, i32
  }
  func.func @transform_4(%arg0: i32) -> (i32, i32) {
    %c0_i32 = arith.constant 0 : i32
    %c0_i32_0 = arith.constant 0 : i32
    %c0_i32_1 = arith.constant 0 : i32
    return %c0_i32, %c0_i32_0 : i32, i32
  }
  func.func @transform_5(%arg0: i32) -> (i32, i32) {
    %c0_i32 = arith.constant 0 : i32
    %c0_i32_0 = arith.constant 0 : i32
    %c0_i32_1 = arith.constant 0 : i32
    return %c0_i32, %c0_i32_0 : i32, i32
  }
  func.func @transform_6(%arg0: i32) -> (i32, i32) {
    %c0_i32 = arith.constant 0 : i32
    %c0_i32_0 = arith.constant 0 : i32
    %c0_i32_1 = arith.constant 0 : i32
    return %c0_i32, %c0_i32_0 : i32, i32
  }
  func.func @transform_7(%arg0: i32) -> (i32, i32) {
    %c0_i32 = arith.constant 0 : i32
    %c0_i32_0 = arith.constant 0 : i32
    return %arg0, %c0_i32 : i32, i32
  }
}

</mosaic_0001>

<llo_original>
// kernel: tpu_custom_call.1
$region0: #{tpu_custom_call.1}
  #allocation0 [shape = 'u32[]', space=smem, size = 0x4, offset = 0x4, fixed_abs, tag = 'smem constant byte address 0x4 - core index']
  #allocation1 [shape = 'u32[144,128]{1,0:T(1,128)}', space=vmem, size = 0x12000, scoped, tag = 'internal scratch']
  %s0 = inlined_call_operand.hbm [shape: f32[256,128], index: 0, kind: input, shape index: {}]
  %s1 = inlined_call_operand.hbm [shape: f32[256,128], index: 1, kind: input, shape index: {}]
  %s2 = inlined_call_operand.hbm [shape: f32[256,128], index: 2, kind: input, shape index: {}]
  %s3 = inlined_call_operand.hbm [shape: f32[256,128], index: 3, kind: input, shape index: {}]
  %s4 = inlined_call_operand.hbm [shape: f32[128,128], index: 4, kind: input, shape index: {}]
  %s5 = inlined_call_operand.hbm [shape: f32[128,128], index: 5, kind: input, shape index: {}]
  %s6 = inlined_call_operand.hbm [shape: f32[128,128], index: 6, kind: input, shape index: {}]
  %s7 = inlined_call_operand.hbm [shape: f32[256,128], index: 7, kind: output, shape index: {}]
  %s8 = sld [smem:[#allocation0]]
  $region89: #{tpu_custom_call.1} parent=0
    _
  %s10 = ssub.s32 1, %s8
  %s11 = scalar_select 0, %s10, %s8
  $region1: #{tpu_custom_call.1} parent=0
    #allocation2 [shape = 'u8[65536]{0}', space=vmem, size = 0x10000, scoped, tag = 'input window, operand 0']
    #allocation3 [shape = 's32[2]{0}', space=sflag, size = 0x8, scoped, tag = 'scoped memory for tpu_custom_call.1']
    #allocation4 [shape = 's32[2]{0}', space=sflag, size = 0x8, scoped, tag = 'scoped memory for tpu_custom_call.1']
    #allocation5 [shape = 'u8[65536]{0}', space=vmem, size = 0x10000, scoped, tag = 'input window, operand 1']
    #allocation6 [shape = 's32[2]{0}', space=sflag, size = 0x8, scoped, tag = 'scoped memory for tpu_custom_call.1']
    #allocation7 [shape = 'u8[65536]{0}', space=vmem, size = 0x10000, scoped, tag = 'input window, operand 2']
    #allocation8 [shape = 'u8[65536]{0}', space=vmem, size = 0x10000, scoped, tag = 'input window, operand 3']
    #allocation9 [shape = 's32[2]{0}', space=sflag, size = 0x8, scoped, tag = 'scoped memory for tpu_custom_call.1']
    #allocation10 [shape = 'u8[65536]{0}', space=vmem, size = 0x10000, scoped, tag = 'input window, operand 4, single buffered']
    #allocation11 [shape = 'u8[65536]{0}', space=vmem, size = 0x10000, scoped, tag = 'input window, operand 5, single buffered']
    #allocation12 [shape = 's32[1]{0}', space=sflag, size = 0x4, scoped, tag = 'scoped memory for tpu_custom_call.1']
    #allocation13 [shape = 'u8[65536]{0}', space=vmem, size = 0x10000, scoped, tag = 'input window, operand 6, single buffered']
    #allocation14 [shape = 'u8[65536]{0}', space=vmem, size = 0x10000, scoped, tag = 'output window, operand 0']
    %12 = vsyncpa [#allocation3], 0
    %s13 = scalar_lea.sflag [#allocation3], 1
    %14 = vsyncpa %s13, 0
    %15 = vsyncpa [#allocation6], 0
    %s16 = scalar_lea.sflag [#allocation6], 1
    %17 = vsyncpa %s16, 0
    %18 = vsyncpa [#allocation9], 0
    %s19 = scalar_lea.sflag [#allocation9], 1
    %20 = vsyncpa %s19, 0
    %21 = vsyncpa [#allocation12], 0
    %22 = vsyncpa [#allocation4], 0
    %s23 = scalar_lea.sflag [#allocation4], 1
    %24 = vsyncpa %s23, 0
    loop: start=0, step=1, limit=6
    $region2: #{tpu_custom_call.1} parent=1 // loop_pre_header
      _
    $region3: #{tpu_custom_call.1} parent=1 // loop_header
      %s26 = sphi 0, %s30
      %p27 = scmp.ge.s32.totalorder %s26, 6
      %s36 = sphi 0, %s38
      %s39 = sphi 0, %s36
      %s40 = sphi 0, %s39
      %s56 = sphi 0, %s40
      %s62 = sphi 0, %s64
      %s65 = sphi 0, %s62
      %s66 = sphi 0, %s65
      %s82 = sphi 0, %s66
      %s88 = sphi 0, %s90
      %s91 = sphi 0, %s88
      %s92 = sphi 0, %s91
      %s108 = sphi 0, %s92
      %s114 = sphi 0, %s116
      %s117 = sphi 0, %s114
      %s118 = sphi 0, %s117
      %s134 = sphi 0, %s118
      %s138 = sphi 0, %s138
      %s140 = sphi 0, %s138
      %s141 = sphi 0, %s140
      %s155 = sphi 0, %s141
      %s159 = sphi 0, %s159
      %s161 = sphi 0, %s159
      %s162 = sphi 0, %s161
      %s176 = sphi 0, %s162
      %s180 = sphi 0, %s180
      %s182 = sphi 0, %s180
      %s183 = sphi 0, %s182
      %s197 = sphi 0, %s183
      %s203 = sphi 0, %s205
      %s206 = sphi 0, %s203
      %s207 = sphi 0, %s206
      %s223 = sphi 0, %s207
    $region4: #{tpu_custom_call.1} parent=1 // loop_header_branch
      %29 = sbr.rel (%p27) target = $region8
    $region5: #{tpu_custom_call.1} parent=1 // loop_body
      %s31 = ssub.s32 %s26, 1
      %s32 = ssub.s32 %s26, 2
      %s33 = sadd.s32 %s26, 1
      %s34 = ssub.s32 %s26, %s33
      %p35 = scmp.eq.s32.totalorder %s34, 0
      %s37 = sadd.s32 %s36, 1
      %s38 = scalar_select %p35, %s36, %s37
      %p41 = pneg %p35
      %p42 = scmp.eq.s32.totalorder %s26, 3
      %p43 = por %p41, %p42
      %p44 = scmp.ne.s32.totalorder %s36, %s39
      %p45 = scmp.eq.s32.totalorder %s26, 0
      %p46 = por %p44, %p45
      %p47 = scmp.ne.s32.totalorder %s36, %s39
      %p48 = scmp.eq.s32.totalorder %s31, 3
      %p49 = por %p47, %p48
      %p50 = scmp.ne.s32.totalorder %s39, %s40
      %p51 = scmp.eq.s32.totalorder %s31, 0
      %p52 = por %p50, %p51
      %p53 = scmp.ne.s32.totalorder %s39, %s40
      %p54 = scmp.eq.s32.totalorder %s32, 3
      %p55 = por %p53, %p54
      %p57 = scmp.ne.s32.totalorder %s40, %s56
      %p58 = scmp.eq.s32.totalorder %s32, 0
      %p59 = por %p57, %p58
      %s60 = ssub.s32 %s26, %s33
      %p61 = scmp.eq.s32.totalorder %s60, 0
      %s63 = sadd.s32 %s62, 1
      %s64 = scalar_select %p61, %s62, %s63
      %p67 = pneg %p61
      %p68 = scmp.eq.s32.totalorder %s26, 3
      %p69 = por %p67, %p68
      %p70 = scmp.ne.s32.totalorder %s62, %s65
      %p71 = scmp.eq.s32.totalorder %s26, 0
      %p72 = por %p70, %p71
      %p73 = scmp.ne.s32.totalorder %s62, %s65
      %p74 = scmp.eq.s32.totalorder %s31, 3
      %p75 = por %p73, %p74
      %p76 = scmp.ne.s32.totalorder %s65, %s66
      %p77 = scmp.eq.s32.totalorder %s31, 0
      %p78 = por %p76, %p77
      %p79 = scmp.ne.s32.totalorder %s65, %s66
      %p80 = scmp.eq.s32.totalorder %s32, 3
      %p81 = por %p79, %p80
      %p83 = scmp.ne.s32.totalorder %s66, %s82
      %p84 = scmp.eq.s32.totalorder %s32, 0
      %p85 = por %p83, %p84
      %s86 = ssub.s32 %s26, %s33
      %p87 = scmp.eq.s32.totalorder %s86, 0
      %s89 = sadd.s32 %s88, 1
      %s90 = scalar_select %p87, %s88, %s89
      %p93 = pneg %p87
      %p94 = scmp.eq.s32.totalorder %s26, 3
      %p95 = por %p93, %p94
      %p96 = scmp.ne.s32.totalorder %s88, %s91
      %p97 = scmp.eq.s32.totalorder %s26, 0
      %p98 = por %p96, %p97
      %p99 = scmp.ne.s32.totalorder %s88, %s91
      %p100 = scmp.eq.s32.totalorder %s31, 3
      %p101 = por %p99, %p100
      %p102 = scmp.ne.s32.totalorder %s91, %s92
      %p103 = scmp.eq.s32.totalorder %s31, 0
      %p104 = por %p102, %p103
      %p105 = scmp.ne.s32.totalorder %s91, %s92
      %p106 = scmp.eq.s32.totalorder %s32, 3
      %p107 = por %p105, %p106
      %p109 = scmp.ne.s32.totalorder %s92, %s108
      %p110 = scmp.eq.s32.totalorder %s32, 0
      %p111 = por %p109, %p110
      %s112 = ssub.s32 %s26, %s33
      %p113 = scmp.eq.s32.totalorder %s112, 0
      %s115 = sadd.s32 %s114, 1
      %s116 = scalar_select %p113, %s114, %s115
      %p119 = pneg %p113
      %p120 = scmp.eq.s32.totalorder %s26, 3
      %p121 = por %p119, %p120
      %p122 = scmp.ne.s32.totalorder %s114, %s117
      %p123 = scmp.eq.s32.totalorder %s26, 0
      %p124 = por %p122, %p123
      %p125 = scmp.ne.s32.totalorder %s114, %s117
      %p126 = scmp.eq.s32.totalorder %s31, 3
      %p127 = por %p125, %p126
      %p128 = scmp.ne.s32.totalorder %s117, %s118
      %p129 = scmp.eq.s32.totalorder %s31, 0
      %p130 = por %p128, %p129
      %p131 = scmp.ne.s32.totalorder %s117, %s118
      %p132 = scmp.eq.s32.totalorder %s32, 3
      %p133 = por %p131, %p132
      %p135 = scmp.ne.s32.totalorder %s118, %s134
      %p136 = scmp.eq.s32.totalorder %s32, 0
      %p137 = por %p135, %p136
      %s139 = sadd.s32 %s138, 1
      %p142 = scmp.eq.s32.totalorder %s26, 3
      %p143 = scmp.ne.s32.totalorder %s138, %s140
      %p144 = scmp.eq.s32.totalorder %s26, 0
      %p145 = por %p143, %p144
      %p146 = scmp.ne.s32.totalorder %s138, %s140
      %p147 = scmp.eq.s32.totalorder %s31, 3
      %p148 = por %p146, %p147
      %p149 = scmp.ne.s32.totalorder %s140, %s141
      %p150 = scmp.eq.s32.totalorder %s31, 0
      %p151 = por %p149, %p150
      %p152 = scmp.ne.s32.totalorder %s140, %s141
      %p153 = scmp.eq.s32.totalorder %s32, 3
      %p154 = por %p152, %p153
      %p156 = scmp.ne.s32.totalorder %s141, %s155
      %p157 = scmp.eq.s32.totalorder %s32, 0
      %p158 = por %p156, %p157
      %s160 = sadd.s32 %s159, 1
      %p163 = scmp.eq.s32.totalorder %s26, 3
      %p164 = scmp.ne.s32.totalorder %s159, %s161
      %p165 = scmp.eq.s32.totalorder %s26, 0
      %p166 = por %p164, %p165
      %p167 = scmp.ne.s32.totalorder %s159, %s161
      %p168 = scmp.eq.s32.totalorder %s31, 3
      %p169 = por %p167, %p168
      %p170 = scmp.ne.s32.totalorder %s161, %s162
      %p171 = scmp.eq.s32.totalorder %s31, 0
      %p172 = por %p170, %p171
      %p173 = scmp.ne.s32.totalorder %s161, %s162
      %p174 = scmp.eq.s32.totalorder %s32, 3
      %p175 = por %p173, %p174
      %p177 = scmp.ne.s32.totalorder %s162, %s176
      %p178 = scmp.eq.s32.totalorder %s32, 0
      %p179 = por %p177, %p178
      %s181 = sadd.s32 %s180, 1
      %p184 = scmp.eq.s32.totalorder %s26, 3
      %p185 = scmp.ne.s32.totalorder %s180, %s182
      %p186 = scmp.eq.s32.totalorder %s26, 0
      %p187 = por %p185, %p186
      %p188 = scmp.ne.s32.totalorder %s180, %s182
      %p189 = scmp.eq.s32.totalorder %s31, 3
      %p190 = por %p188, %p189
      %p191 = scmp.ne.s32.totalorder %s182, %s183
      %p192 = scmp.eq.s32.totalorder %s31, 0
      %p193 = por %p191, %p192
      %p194 = scmp.ne.s32.totalorder %s182, %s183
      %p195 = scmp.eq.s32.totalorder %s32, 3
      %p196 = por %p194, %p195
      %p198 = scmp.ne.s32.totalorder %s183, %s197
      %p199 = scmp.eq.s32.totalorder %s32, 0
      %p200 = por %p198, %p199
      %s201 = ssub.s32 %s26, %s33
      %p202 = scmp.eq.s32.totalorder %s201, 0
      %s204 = sadd.s32 %s203, 1
      %s205 = scalar_select %p202, %s203, %s204
      %p208 = pneg %p202
      %p209 = scmp.eq.s32.totalorder %s26, 3
      %p210 = por %p208, %p209
      %p211 = scmp.ne.s32.totalorder %s203, %s206
      %p212 = scmp.eq.s32.totalorder %s26, 0
      %p213 = por %p211, %p212
      %p214 = scmp.ne.s32.totalorder %s203, %s206
      %p215 = scmp.eq.s32.totalorder %s31, 3
      %p216 = por %p214, %p215
      %p217 = scmp.ne.s32.totalorder %s206, %s207
      %p218 = scmp.eq.s32.totalorder %s31, 0
      %p219 = por %p217, %p218
      %p220 = scmp.ne.s32.totalorder %s206, %s207
      %p221 = scmp.eq.s32.totalorder %s32, 3
      %p222 = por %p220, %p221
      %p224 = scmp.ne.s32.totalorder %s207, %s223
      %p225 = scmp.eq.s32.totalorder %s32, 0
      %p226 = por %p224, %p225
      %p227 = scmp.le.s32.totalorder 1, %s26
      %p228 = scmp.lt.s32.totalorder %s26, 5
      %p229 = pnand %p227, %p228
      %p230 = pneg %p229
      // Predicated region
      $region9: #{tpu_custom_call.1} parent=5 // pred_check
        _
      $region10: #{tpu_custom_call.1} parent=5 // pred_check_branch
        %232 = sbr.rel (%p229) target = $region12
      $region11: #{tpu_custom_call.1} parent=5 // pred_region
        %s233 = ssub.s32 %s26, 1
        // Predicated region
        $region13: #{tpu_custom_call.1} parent=11 // pred_check
          %p234 = pneg %p151
        $region14: #{tpu_custom_call.1} parent=11 // pred_check_branch
          %236 = sbr.rel (%p234) target = $region16
        $region15: #{tpu_custom_call.1} parent=11 // pred_region
          %s238 = ssub.s32 2048, 2048
          %239 = vsyncadd [#allocation9], %s238
          %s240 = sshll.u32 [#allocation10], 4
          %s241 = int_to_ptr.vmem [resolvable:$true] %s240
          %246 = dma.hbm_to_vmem [thread:$0]  %s4, 2048, %s241, [#allocation9], 128, 128, 8
        $region16: #{tpu_custom_call.1} parent=11 // pred_fallthru
          _
        // Predicated region
        $region17: #{tpu_custom_call.1} parent=11 // pred_check
          %p247 = pneg %p172
        $region18: #{tpu_custom_call.1} parent=11 // pred_check_branch
          %249 = sbr.rel (%p247) target = $region20
        $region19: #{tpu_custom_call.1} parent=11 // pred_region
          %s251 = ssub.s32 2048, 2048
          %252 = vsyncadd [#allocation12], %s251
          %s253 = sshll.u32 [#allocation11], 4
          %s254 = int_to_ptr.vmem [resolvable:$true] %s253
          %259 = dma.hbm_to_vmem [thread:$0]  %s5, 2048, %s254, [#allocation12], 128, 128, 8
        $region20: #{tpu_custom_call.1} parent=11 // pred_fallthru
          _
        // Predicated region
        $region21: #{tpu_custom_call.1} parent=11 // pred_check
          %p260 = pneg %p193
        $region22: #{tpu_custom_call.1} parent=11 // pred_check_branch
          %262 = sbr.rel (%p260) target = $region24
        $region23: #{tpu_custom_call.1} parent=11 // pred_region
          %s264 = ssub.s32 2048, 2048
          %265 = vsyncadd [#allocation12], %s264
          %s266 = sshll.u32 [#allocation13], 4
          %s267 = int_to_ptr.vmem [resolvable:$true] %s266
          %272 = dma.hbm_to_vmem [thread:$0]  %s6, 2048, %s267, [#allocation12], 128, 128, 8
        $region24: #{tpu_custom_call.1} parent=11 // pred_fallthru
          _
      $region12: #{tpu_custom_call.1} parent=5 // pred_fallthru
        _
      %p273 = scmp.lt.s32.totalorder %s26, 4
      // Predicated region
      $region25: #{tpu_custom_call.1} parent=5 // pred_check
        %p274 = pneg %p273
      $region26: #{tpu_custom_call.1} parent=5 // pred_check_branch
        %276 = sbr.rel (%p274) target = $region28
      $region27: #{tpu_custom_call.1} parent=5 // pred_region
        // Predicated region
        $region29: #{tpu_custom_call.1} parent=27 // pred_check
          %p277 = pneg %p46
        $region30: #{tpu_custom_call.1} parent=27 // pred_check_branch
          %279 = sbr.rel (%p277) target = $region32
        $region31: #{tpu_custom_call.1} parent=27 // pred_region
          %s280 = sand.u32 %s36, 1
          %s281 = scalar_lea.sflag [#allocation3], %s280
          %s282 = sand.u32 %s36, 1
          %s283 = smul.addr %s282, 64
          %s284 = scalar_lea.vmem [#allocation2], %s283
          %s285 = smul.u32 8, %s26
          %s287 = ssub.s32 1024, 1024
          %288 = vsyncadd %s281, %s287
          %s289 = smul.addr %s285, 128
          %s290 = scalar_lea.hbm %s0, %s289
          %s291 = sshll.u32 %s284, 4
          %s292 = int_to_ptr.vmem [resolvable:$true] %s291
          %297 = dma.hbm_to_vmem [thread:$0]  %s290, 1024, %s292, %s281, 128, 128, 8
        $region32: #{tpu_custom_call.1} parent=27 // pred_fallthru
          _
        // Predicated region
        $region33: #{tpu_custom_call.1} parent=27 // pred_check
          %p298 = pneg %p72
        $region34: #{tpu_custom_call.1} parent=27 // pred_check_branch
          %300 = sbr.rel (%p298) target = $region36
        $region35: #{tpu_custom_call.1} parent=27 // pred_region
          %s301 = sand.u32 %s26, 1
          %s302 = scalar_lea.sflag [#allocation6], %s301
          %s303 = sand.u32 %s62, 1
          %s304 = smul.addr %s303, 64
          %s305 = scalar_lea.vmem [#allocation5], %s304
          %s306 = smul.u32 8, %s26
          %s308 = ssub.s32 1024, 1024
          %309 = vsyncadd %s302, %s308
          %s310 = smul.addr %s306, 128
          %s311 = scalar_lea.hbm %s1, %s310
          %s312 = sshll.u32 %s305, 4
          %s313 = int_to_ptr.vmem [resolvable:$true] %s312
          %318 = dma.hbm_to_vmem [thread:$0]  %s311, 1024, %s313, %s302, 128, 128, 8
        $region36: #{tpu_custom_call.1} parent=27 // pred_fallthru
          _
        // Predicated region
        $region37: #{tpu_custom_call.1} parent=27 // pred_check
          %p319 = pneg %p98
        $region38: #{tpu_custom_call.1} parent=27 // pred_check_branch
          %321 = sbr.rel (%p319) target = $region40
        $region39: #{tpu_custom_call.1} parent=27 // pred_region
          %s322 = sand.u32 %s26, 1
          %s323 = scalar_lea.sflag [#allocation6], %s322
          %s324 = sand.u32 %s88, 1
          %s325 = smul.addr %s324, 64
          %s326 = scalar_lea.vmem [#allocation7], %s325
          %s327 = smul.u32 8, %s26
          %s329 = ssub.s32 1024, 1024
          %330 = vsyncadd %s323, %s329
          %s331 = smul.addr %s327, 128
          %s332 = scalar_lea.hbm %s2, %s331
          %s333 = sshll.u32 %s326, 4
          %s334 = int_to_ptr.vmem [resolvable:$true] %s333
          %339 = dma.hbm_to_vmem [thread:$0]  %s332, 1024, %s334, %s323, 128, 128, 8
        $region40: #{tpu_custom_call.1} parent=27 // pred_fallthru
          _
        // Predicated region
        $region41: #{tpu_custom_call.1} parent=27 // pred_check
          %p340 = pneg %p124
        $region42: #{tpu_custom_call.1} parent=27 // pred_check_branch
          %342 = sbr.rel (%p340) target = $region44
        $region43: #{tpu_custom_call.1} parent=27 // pred_region
          %s343 = sand.u32 %s26, 1
          %s344 = scalar_lea.sflag [#allocation9], %s343
          %s345 = sand.u32 %s114, 1
          %s346 = smul.addr %s345, 64
          %s347 = scalar_lea.vmem [#allocation8], %s346
          %s348 = smul.u32 8, %s26
          %s350 = ssub.s32 1024, 1024
          %351 = vsyncadd %s344, %s350
          %s352 = smul.addr %s348, 128
          %s353 = scalar_lea.hbm %s3, %s352
          %s354 = sshll.u32 %s347, 4
          %s355 = int_to_ptr.vmem [resolvable:$true] %s354
          %360 = dma.hbm_to_vmem [thread:$0]  %s353, 1024, %s355, %s344, 128, 128, 8
        $region44: #{tpu_custom_call.1} parent=27 // pred_fallthru
          _
      $region28: #{tpu_custom_call.1} parent=5 // pred_fallthru
        _
      %p361 = scmp.le.s32.totalorder 1, %s26
      %p362 = scmp.lt.s32.totalorder %s26, 5
      %p363 = pnand %p361, %p362
      %p364 = pneg %p363
      // Predicated region
      $region45: #{tpu_custom_call.1} parent=5 // pred_check
        _
      $region46: #{tpu_custom_call.1} parent=5 // pred_check_branch
        %366 = sbr.rel (%p363) target = $region48
      $region47: #{tpu_custom_call.1} parent=5 // pred_region
        %s367 = ssub.s32 %s26, 1
        %s368 = sand.u32 %s39, 1
        %s369 = scalar_lea.sflag [#allocation3], %s368
        %s370 = sand.u32 %s39, 1
        %s371 = smul.addr %s370, 64
        %s372 = scalar_lea.vmem [#allocation2], %s371
        // Predicated region
        $region49: #{tpu_custom_call.1} parent=47 // pred_check
          %p373 = pneg %p52
        $region50: #{tpu_custom_call.1} parent=47 // pred_check_branch
          %375 = sbr.rel (%p373) target = $region52
        $region51: #{tpu_custom_call.1} parent=47 // pred_region
          %376 = dma.done %s369, 1024
        $region52: #{tpu_custom_call.1} parent=47 // pred_fallthru
          _
        %s377 = sand.u32 %s31, 1
        %s378 = scalar_lea.sflag [#allocation6], %s377
        %s379 = sand.u32 %s65, 1
        %s380 = smul.addr %s379, 64
        %s381 = scalar_lea.vmem [#allocation5], %s380
        // Predicated region
        $region53: #{tpu_custom_call.1} parent=47 // pred_check
          %p382 = pneg %p78
        $region54: #{tpu_custom_call.1} parent=47 // pred_check_branch
          %384 = sbr.rel (%p382) target = $region56
        $region55: #{tpu_custom_call.1} parent=47 // pred_region
          %385 = dma.done %s378, 1024
        $region56: #{tpu_custom_call.1} parent=47 // pred_fallthru
          _
        %s386 = sand.u32 %s31, 1
        %s387 = scalar_lea.sflag [#allocation6], %s386
        %s388 = sand.u32 %s91, 1
        %s389 = smul.addr %s388, 64
        %s390 = scalar_lea.vmem [#allocation7], %s389
        // Predicated region
        $region57: #{tpu_custom_call.1} parent=47 // pred_check
          %p391 = pneg %p104
        $region58: #{tpu_custom_call.1} parent=47 // pred_check_branch
          %393 = sbr.rel (%p391) target = $region60
        $region59: #{tpu_custom_call.1} parent=47 // pred_region
          %394 = dma.done %s387, 1024
        $region60: #{tpu_custom_call.1} parent=47 // pred_fallthru
          _
        %s395 = sand.u32 %s31, 1
        %s396 = scalar_lea.sflag [#allocation9], %s395
        %s397 = sand.u32 %s117, 1
        %s398 = smul.addr %s397, 64
        %s399 = scalar_lea.vmem [#allocation8], %s398
        // Predicated region
        $region61: #{tpu_custom_call.1} parent=47 // pred_check
          %p400 = pneg %p130
        $region62: #{tpu_custom_call.1} parent=47 // pred_check_branch
          %402 = sbr.rel (%p400) target = $region64
        $region63: #{tpu_custom_call.1} parent=47 // pred_region
          %403 = dma.done %s396, 1024
        $region64: #{tpu_custom_call.1} parent=47 // pred_fallthru
          _
        // Predicated region
        $region65: #{tpu_custom_call.1} parent=47 // pred_check
          %p404 = pneg %p151
        $region66: #{tpu_custom_call.1} parent=47 // pred_check_branch
          %406 = sbr.rel (%p404) target = $region68
        $region67: #{tpu_custom_call.1} parent=47 // pred_region
          %407 = dma.done [#allocation9], 2048
        $region68: #{tpu_custom_call.1} parent=47 // pred_fallthru
          _
        // Predicated region
        $region69: #{tpu_custom_call.1} parent=47 // pred_check
          %p408 = pneg %p172
        $region70: #{tpu_custom_call.1} parent=47 // pred_check_branch
          %410 = sbr.rel (%p408) target = $region72
        $region71: #{tpu_custom_call.1} parent=47 // pred_region
          %411 = dma.done [#allocation12], 2048
        $region72: #{tpu_custom_call.1} parent=47 // pred_fallthru
          _
        // Predicated region
        $region73: #{tpu_custom_call.1} parent=47 // pred_check
          %p412 = pneg %p193
        $region74: #{tpu_custom_call.1} parent=47 // pred_check_branch
          %414 = sbr.rel (%p412) target = $region76
        $region75: #{tpu_custom_call.1} parent=47 // pred_region
          %415 = dma.done [#allocation12], 2048
        $region76: #{tpu_custom_call.1} parent=47 // pred_fallthru
          _
        %s416 = sand.u32 %s39, 1
        %s417 = scalar_lea.sflag [#allocation3], %s416
        %s418 = sand.u32 %s39, 1
        %s419 = smul.addr %s418, 64
        %s420 = scalar_lea.vmem [#allocation2], %s419
        %p421 = pneg %p52
        %p422 = pneg %p49
        %s423 = sand.u32 %s31, 1
        %s424 = scalar_lea.sflag [#allocation6], %s423
        %s425 = sand.u32 %s65, 1
        %s426 = smul.addr %s425, 64
        %s427 = scalar_lea.vmem [#allocation5], %s426
        %p428 = pneg %p78
        %p429 = pneg %p75
        %s430 = sand.u32 %s31, 1
        %s431 = scalar_lea.sflag [#allocation6], %s430
        %s432 = sand.u32 %s91, 1
        %s433 = smul.addr %s432, 64
        %s434 = scalar_lea.vmem [#allocation7], %s433
        %p435 = pneg %p104
        %p436 = pneg %p101
        %s437 = sand.u32 %s31, 1
        %s438 = scalar_lea.sflag [#allocation9], %s437
        %s439 = sand.u32 %s117, 1
        %s440 = smul.addr %s439, 64
        %s441 = scalar_lea.vmem [#allocation8], %s440
        %p442 = pneg %p130
        %p443 = pneg %p127
        %p444 = pneg %p151
        %p445 = pneg %p148
        %p446 = pneg %p172
        %p447 = pneg %p169
        %p448 = pneg %p193
        %p449 = pneg %p190
        %p450 = pneg %p219
        %p451 = pneg %p216
        %s452 = sand.u32 %s206, 1
        %s453 = scalar_lea.sflag [#allocation4], %s452
        %s454 = sand.u32 %s206, 1
        %s455 = smul.addr %s454, 64
        %s456 = scalar_lea.vmem [#allocation14], %s455
        %s457 = smul.u32 8, %s31
        %s458 = smul.u32 8, %s31
        %s459 = smul.u32 8, %s31
        %s460 = smul.u32 8, %s31
        %s461 = smul.u32 8, %s31
        %v462 = vld [vmem:[#allocation10] sm:$0xff]
        %v463 = vld [vmem:[#allocation10 + $0x8] sm:$0xff]
        %v464 = vld [vmem:[#allocation10 + $0x10] sm:$0xff]
        %v465 = vld [vmem:[#allocation10 + $0x18] sm:$0xff]
        %v466 = vld [vmem:[#allocation10 + $0x20] sm:$0xff]
        %v467 = vld [vmem:[#allocation10 + $0x28] sm:$0xff]
        %v468 = vld [vmem:[#allocation10 + $0x30] sm:$0xff]
        %v469 = vld [vmem:[#allocation10 + $0x38] sm:$0xff]
        %v470 = vld [vmem:[#allocation10 + $0x40] sm:$0xff]
        %v471 = vld [vmem:[#allocation10 + $0x48] sm:$0xff]
        %v472 = vld [vmem:[#allocation10 + $0x50] sm:$0xff]
        %v473 = vld [vmem:[#allocation10 + $0x58] sm:$0xff]
        %v474 = vld [vmem:[#allocation10 + $0x60] sm:$0xff]
        %v475 = vld [vmem:[#allocation10 + $0x68] sm:$0xff]
        %v476 = vld [vmem:[#allocation10 + $0x70] sm:$0xff]
        %v477 = vld [vmem:[#allocation10 + $0x78] sm:$0xff]
        %v478 = vld [vmem:[#allocation11] sm:$0xff]
        %v479 = vld [vmem:[#allocation11 + $0x8] sm:$0xff]
        %v480 = vld [vmem:[#allocation11 + $0x10] sm:$0xff]
        %v481 = vld [vmem:[#allocation11 + $0x18] sm:$0xff]
        %v482 = vld [vmem:[#allocation11 + $0x20] sm:$0xff]
        %v483 = vld [vmem:[#allocation11 + $0x28] sm:$0xff]
        %v484 = vld [vmem:[#allocation11 + $0x30] sm:$0xff]
        %v485 = vld [vmem:[#allocation11 + $0x38] sm:$0xff]
        %v486 = vld [vmem:[#allocation11 + $0x40] sm:$0xff]
        %v487 = vld [vmem:[#allocation11 + $0x48] sm:$0xff]
        %v488 = vld [vmem:[#allocation11 + $0x50] sm:$0xff]
        %v489 = vld [vmem:[#allocation11 + $0x58] sm:$0xff]
        %v490 = vld [vmem:[#allocation11 + $0x60] sm:$0xff]
        %v491 = vld [vmem:[#allocation11 + $0x68] sm:$0xff]
        %v492 = vld [vmem:[#allocation11 + $0x70] sm:$0xff]
        %v493 = vld [vmem:[#allocation11 + $0x78] sm:$0xff]
        %v494 = vld [vmem:[#allocation13] sm:$0xff]
        %v495 = vld [vmem:[#allocation13 + $0x8] sm:$0xff]
        %v496 = vld [vmem:[#allocation13 + $0x10] sm:$0xff]
        %v497 = vld [vmem:[#allocation13 + $0x18] sm:$0xff]
        %v498 = vld [vmem:[#allocation13 + $0x20] sm:$0xff]
        %v499 = vld [vmem:[#allocation13 + $0x28] sm:$0xff]
        %v500 = vld [vmem:[#allocation13 + $0x30] sm:$0xff]
        %v501 = vld [vmem:[#allocation13 + $0x38] sm:$0xff]
        %v502 = vld [vmem:[#allocation13 + $0x40] sm:$0xff]
        %v503 = vld [vmem:[#allocation13 + $0x48] sm:$0xff]
        %v504 = vld [vmem:[#allocation13 + $0x50] sm:$0xff]
        %v505 = vld [vmem:[#allocation13 + $0x58] sm:$0xff]
        %v506 = vld [vmem:[#allocation13 + $0x60] sm:$0xff]
        %v507 = vld [vmem:[#allocation13 + $0x68] sm:$0xff]
        %v508 = vld [vmem:[#allocation13 + $0x70] sm:$0xff]
        %v509 = vld [vmem:[#allocation13 + $0x78] sm:$0xff]
        %v510 = vld [vmem:[%s372] sm:$0xff]
        %v511 = vld [vmem:[%s372 + $0x8] sm:$0xff]
        %v512 = vld [vmem:[%s372 + $0x10] sm:$0xff]
        %v513 = vld [vmem:[%s372 + $0x18] sm:$0xff]
        %v514 = vld [vmem:[%s372 + $0x20] sm:$0xff]
        %v515 = vld [vmem:[%s372 + $0x28] sm:$0xff]
        %v516 = vld [vmem:[%s372 + $0x30] sm:$0xff]
        %v517 = vld [vmem:[%s372 + $0x38] sm:$0xff]
        %v518 = vld [vmem:[%s390] sm:$0xff]
        %v519 = vld [vmem:[%s390 + $0x8] sm:$0xff]
        %v520 = vld [vmem:[%s390 + $0x10] sm:$0xff]
        %v521 = vld [vmem:[%s390 + $0x18] sm:$0xff]
        %v522 = vld [vmem:[%s390 + $0x20] sm:$0xff]
        %v523 = vld [vmem:[%s390 + $0x28] sm:$0xff]
        %v524 = vld [vmem:[%s390 + $0x30] sm:$0xff]
        %v525 = vld [vmem:[%s390 + $0x38] sm:$0xff]
        %v526 = vld [vmem:[%s381] sm:$0xff]
        %v527 = vld [vmem:[%s381 + $0x8] sm:$0xff]
        %v528 = vld [vmem:[%s381 + $0x10] sm:$0xff]
        %v529 = vld [vmem:[%s381 + $0x18] sm:$0xff]
        %v530 = vld [vmem:[%s381 + $0x20] sm:$0xff]
        %v531 = vld [vmem:[%s381 + $0x28] sm:$0xff]
        %v532 = vld [vmem:[%s381 + $0x30] sm:$0xff]
        %v533 = vld [vmem:[%s381 + $0x38] sm:$0xff]
        %534 = vmatprep.subr.mxu0 0.0
        %535 = vmatpush1.msra.mxu0 %v478
        %536 = vmatprep.subr.mxu0 0.0
        %537 = vmatpush1.msra.mxu0 %v479
        %538 = vmatprep.subr.mxu0 0.0
        %539 = vmatpush1.msra.mxu0 %v480
        %540 = vmatprep.subr.mxu0 0.0
        %541 = vmatpush1.msra.mxu0 %v481
        %542 = vmatprep.subr.mxu0 0.0
        %543 = vmatpush1.msra.mxu0 %v482
        %544 = vmatprep.subr.mxu0 0.0
        %545 = vmatpush1.msra.mxu0 %v483
        %546 = vmatprep.subr.mxu0 0.0
        %547 = vmatpush1.msra.mxu0 %v484
        %548 = vmatprep.subr.mxu0 0.0
        %549 = vmatpush1.msra.mxu0 %v485
        %550 = vmatprep.subr.mxu0 0.0
        %551 = vmatpush1.msra.mxu0 %v486
        %552 = vmatprep.subr.mxu0 0.0
        %553 = vmatpush1.msra.mxu0 %v487
        %554 = vmatprep.subr.mxu0 0.0
        %555 = vmatpush1.msra.mxu0 %v488
        %556 = vmatprep.subr.mxu0 0.0
        %557 = vmatpush1.msra.mxu0 %v489
        %558 = vmatprep.subr.mxu0 0.0
        %559 = vmatpush1.msra.mxu0 %v490
        %560 = vmatprep.subr.mxu0 0.0
        %561 = vmatpush1.msra.mxu0 %v491
        %562 = vmatprep.subr.mxu0 0.0
        %563 = vmatpush1.msra.mxu0 %v492
        %564 = vmatprep.subr.mxu0 0.0
        %565 = vmatpush1.msra.mxu0 %v493
        %566 = vmatprep.subr.mxu0 0.0
        %567 = vmatpush1.msra.mxu0 0.0
        %568 = vmatprep.subr.mxu0 0.0
        %569 = vmatpush1.msra.mxu0 0.0
        %570 = vmatprep.subr.mxu0 0.0
        %571 = vmatpush1.msra.mxu0 0.0
        %572 = vmatprep.subr.mxu0 0.0
        %573 = vmatpush1.msra.mxu0 0.0
        %574 = vmatprep.subr.mxu0 0.0
        %575 = vmatpush1.msra.mxu0 0.0
        %576 = vmatprep.subr.mxu0 0.0
        %577 = vmatpush1.msra.mxu0 0.0
        %578 = vmatprep.subr.mxu0 0.0
        %579 = vmatpush1.msra.mxu0 0.0
        %580 = vmatprep.subr.mxu0 0.0
        %581 = vmatpush1.msra.mxu0 0.0
        %582 = vmatprep.subr.mxu0 0.0
        %583 = vmatpush1.msra.mxu0 0.0
        %584 = vmatprep.subr.mxu0 0.0
        %585 = vmatpush1.msra.mxu0 0.0
        %586 = vmatprep.subr.mxu0 0.0
        %587 = vmatpush1.msra.mxu0 0.0
        %588 = vmatprep.subr.mxu0 0.0
        %589 = vmatpush1.msra.mxu0 0.0
        %590 = vmatprep.subr.mxu0 0.0
        %591 = vmatpush1.msra.mxu0 0.0
        %592 = vmatprep.subr.mxu0 0.0
        %593 = vmatpush1.msra.mxu0 0.0
        %594 = vmatprep.subr.mxu0 0.0
        %595 = vmatpush1.msra.mxu0 0.0
        %596 = vmatprep.subr.mxu0 0.0
        %597 = vmatpush1.msra.mxu0 0.0
        %598 = vmatprep.mubr.f32.mxu0 0.0
        %599 = vmatmul.mubr.f32.gmra.mrb[0].mxu0 %v526
        %v600 = vpop.f32.mrb[0].mxu0
        %v601 = vadd.f32 0.0, %v600
        %v602 = vpop.f32.mrb[0].mxu0
        %603 = vmatprep.mubr.f32.mxu0 0.0
        %604 = vmatmul.mubr.f32.gmra.mrb[0].mxu0 %v527
        %v605 = vpop.f32.mrb[0].mxu0
        %v606 = vadd.f32 0.0, %v605
        %v607 = vpop.f32.mrb[0].mxu0
        %608 = vmatprep.mubr.f32.mxu0 0.0
        %609 = vmatmul.mubr.f32.gmra.mrb[0].mxu0 %v528
        %v610 = vpop.f32.mrb[0].mxu0
        %v611 = vadd.f32 0.0, %v610
        %v612 = vpop.f32.mrb[0].mxu0
        %613 = vmatprep.mubr.f32.mxu0 0.0
        %614 = vmatmul.mubr.f32.gmra.mrb[0].mxu0 %v529
        %v615 = vpop.f32.mrb[0].mxu0
        %v616 = vadd.f32 0.0, %v615
        %v617 = vpop.f32.mrb[0].mxu0
        %618 = vmatprep.mubr.f32.mxu0 0.0
        %619 = vmatmul.mubr.f32.gmra.mrb[0].mxu0 %v530
        %v620 = vpop.f32.mrb[0].mxu0
        %v621 = vadd.f32 0.0, %v620
        %v622 = vpop.f32.mrb[0].mxu0
        %623 = vmatprep.mubr.f32.mxu0 0.0
        %624 = vmatmul.mubr.f32.gmra.mrb[0].mxu0 %v531
        %v625 = vpop.f32.mrb[0].mxu0
        %v626 = vadd.f32 0.0, %v625
        %v627 = vpop.f32.mrb[0].mxu0
        %628 = vmatprep.mubr.f32.mxu0 0.0
        %629 = vmatmul.mubr.f32.gmra.mrb[0].mxu0 %v532
        %v630 = vpop.f32.mrb[0].mxu0
        %v631 = vadd.f32 0.0, %v630
        %v632 = vpop.f32.mrb[0].mxu0
        %633 = vmatprep.mubr.f32.mxu0 0.0
        %634 = vmatmul.mubr.f32.gmra.mrb[0].mxu0 %v533
        %v635 = vpop.f32.mrb[0].mxu0
        %v636 = vadd.f32 0.0, %v635
        %v637 = vpop.f32.mrb[0].mxu0
        %638 = vdwg.mxu0
        %639 = vmatprep.subr.mxu0 0.0
        %640 = vmatpush1.msra.mxu0 %v462
        %641 = vmatprep.subr.mxu0 0.0
        %642 = vmatpush1.msra.mxu0 %v463
        %643 = vmatprep.subr.mxu0 0.0
        %644 = vmatpush1.msra.mxu0 %v464
        %645 = vmatprep.subr.mxu0 0.0
        %646 = vmatpush1.msra.mxu0 %v465
        %647 = vmatprep.subr.mxu0 0.0
        %648 = vmatpush1.msra.mxu0 %v466
        %649 = vmatprep.subr.mxu0 0.0
        %650 = vmatpush1.msra.mxu0 %v467
        %651 = vmatprep.subr.mxu0 0.0
        %652 = vmatpush1.msra.mxu0 %v468
        %653 = vmatprep.subr.mxu0 0.0
        %654 = vmatpush1.msra.mxu0 %v469
        %655 = vmatprep.subr.mxu0 0.0
        %656 = vmatpush1.msra.mxu0 %v470
        %657 = vmatprep.subr.mxu0 0.0
        %658 = vmatpush1.msra.mxu0 %v471
        %659 = vmatprep.subr.mxu0 0.0
        %660 = vmatpush1.msra.mxu0 %v472
        %661 = vmatprep.subr.mxu0 0.0
        %662 = vmatpush1.msra.mxu0 %v473
        %663 = vmatprep.subr.mxu0 0.0
        %664 = vmatpush1.msra.mxu0 %v474
        %665 = vmatprep.subr.mxu0 0.0
        %666 = vmatpush1.msra.mxu0 %v475
        %667 = vmatprep.subr.mxu0 0.0
        %668 = vmatpush1.msra.mxu0 %v476
        %669 = vmatprep.subr.mxu0 0.0
        %670 = vmatpush1.msra.mxu0 %v477
        %671 = vmatprep.subr.mxu0 0.0
        %672 = vmatpush1.msra.mxu0 0.0
        %673 = vmatprep.subr.mxu0 0.0
        %674 = vmatpush1.msra.mxu0 0.0
        %675 = vmatprep.subr.mxu0 0.0
        %676 = vmatpush1.msra.mxu0 0.0
        %677 = vmatprep.subr.mxu0 0.0
        %678 = vmatpush1.msra.mxu0 0.0
        %679 = vmatprep.subr.mxu0 0.0
        %680 = vmatpush1.msra.mxu0 0.0
        %681 = vmatprep.subr.mxu0 0.0
        %682 = vmatpush1.msra.mxu0 0.0
        %683 = vmatprep.subr.mxu0 0.0
        %684 = vmatpush1.msra.mxu0 0.0
        %685 = vmatprep.subr.mxu0 0.0
        %686 = vmatpush1.msra.mxu0 0.0
        %687 = vmatprep.subr.mxu0 0.0
        %688 = vmatpush1.msra.mxu0 0.0
        %689 = vmatprep.subr.mxu0 0.0
        %690 = vmatpush1.msra.mxu0 0.0
        %691 = vmatprep.subr.mxu0 0.0
        %692 = vmatpush1.msra.mxu0 0.0
        %693 = vmatprep.subr.mxu0 0.0
        %694 = vmatpush1.msra.mxu0 0.0
        %695 = vmatprep.subr.mxu0 0.0
        %696 = vmatpush1.msra.mxu0 0.0
        %697 = vmatprep.subr.mxu0 0.0
        %698 = vmatpush1.msra.mxu0 0.0
        %699 = vmatprep.subr.mxu0 0.0
        %700 = vmatpush1.msra.mxu0 0.0
        %701 = vmatprep.subr.mxu0 0.0
        %702 = vmatpush1.msra.mxu0 0.0
        %703 = vmatprep.mubr.f32.mxu0 0.0
        %704 = vmatmul.mubr.f32.gmra.mrb[0].mxu0 %v510
        %v705 = vpop.f32.mrb[0].mxu0
        %v706 = vadd.f32 %v601, %v705
        %v707 = vpop.f32.mrb[0].mxu0
        %708 = vmatprep.mubr.f32.mxu0 0.0
        %709 = vmatmul.mubr.f32.gmra.mrb[0].mxu0 %v511
        %v710 = vpop.f32.mrb[0].mxu0
        %v711 = vadd.f32 %v606, %v710
        %v712 = vpop.f32.mrb[0].mxu0
        %713 = vmatprep.mubr.f32.mxu0 0.0
        %714 = vmatmul.mubr.f32.gmra.mrb[0].mxu0 %v512
        %v715 = vpop.f32.mrb[0].mxu0
        %v716 = vadd.f32 %v611, %v715
        %v717 = vpop.f32.mrb[0].mxu0
        %718 = vmatprep.mubr.f32.mxu0 0.0
        %719 = vmatmul.mubr.f32.gmra.mrb[0].mxu0 %v513
        %v720 = vpop.f32.mrb[0].mxu0
        %v721 = vadd.f32 %v616, %v720
        %v722 = vpop.f32.mrb[0].mxu0
        %723 = vmatprep.mubr.f32.mxu0 0.0
        %724 = vmatmul.mubr.f32.gmra.mrb[0].mxu0 %v514
        %v725 = vpop.f32.mrb[0].mxu0
        %v726 = vadd.f32 %v621, %v725
        %v727 = vpop.f32.mrb[0].mxu0
        %728 = vmatprep.mubr.f32.mxu0 0.0
        %729 = vmatmul.mubr.f32.gmra.mrb[0].mxu0 %v515
        %v730 = vpop.f32.mrb[0].mxu0
        %v731 = vadd.f32 %v626, %v730
        %v732 = vpop.f32.mrb[0].mxu0
        %733 = vmatprep.mubr.f32.mxu0 0.0
        %734 = vmatmul.mubr.f32.gmra.mrb[0].mxu0 %v516
        %v735 = vpop.f32.mrb[0].mxu0
        %v736 = vadd.f32 %v631, %v735
        %v737 = vpop.f32.mrb[0].mxu0
        %738 = vmatprep.mubr.f32.mxu0 0.0
        %739 = vmatmul.mubr.f32.gmra.mrb[0].mxu0 %v517
        %v740 = vpop.f32.mrb[0].mxu0
        %v741 = vadd.f32 %v636, %v740
        %v742 = vpop.f32.mrb[0].mxu0
        %743 = vdwg.mxu0
        %v744 = vmax.f32 %v706, 0.0
        %v745 = vmax.f32 %v711, 0.0
        %v746 = vmax.f32 %v716, 0.0
        %v747 = vmax.f32 %v721, 0.0
        %v748 = vmax.f32 %v726, 0.0
        %v749 = vmax.f32 %v731, 0.0
        %v750 = vmax.f32 %v736, 0.0
        %v751 = vmax.f32 %v741, 0.0
        %752 = vmatprep.subr.mxu0 0.0
        %753 = vmatpush1.msra.mxu0 %v494
        %754 = vmatprep.subr.mxu0 0.0
        %755 = vmatpush1.msra.mxu0 %v495
        %756 = vmatprep.subr.mxu0 0.0
        %757 = vmatpush1.msra.mxu0 %v496
        %758 = vmatprep.subr.mxu0 0.0
        %759 = vmatpush1.msra.mxu0 %v497
        %760 = vmatprep.subr.mxu0 0.0
        %761 = vmatpush1.msra.mxu0 %v498
        %762 = vmatprep.subr.mxu0 0.0
        %763 = vmatpush1.msra.mxu0 %v499
        %764 = vmatprep.subr.mxu0 0.0
        %765 = vmatpush1.msra.mxu0 %v500
        %766 = vmatprep.subr.mxu0 0.0
        %767 = vmatpush1.msra.mxu0 %v501
        %768 = vmatprep.subr.mxu0 0.0
        %769 = vmatpush1.msra.mxu0 %v502
        %770 = vmatprep.subr.mxu0 0.0
        %771 = vmatpush1.msra.mxu0 %v503
        %772 = vmatprep.subr.mxu0 0.0
        %773 = vmatpush1.msra.mxu0 %v504
        %774 = vmatprep.subr.mxu0 0.0
        %775 = vmatpush1.msra.mxu0 %v505
        %776 = vmatprep.subr.mxu0 0.0
        %777 = vmatpush1.msra.mxu0 %v506
        %778 = vmatprep.subr.mxu0 0.0
        %779 = vmatpush1.msra.mxu0 %v507
        %780 = vmatprep.subr.mxu0 0.0
        %781 = vmatpush1.msra.mxu0 %v508
        %782 = vmatprep.subr.mxu0 0.0
        %783 = vmatpush1.msra.mxu0 %v509
        %784 = vmatprep.subr.mxu0 0.0
        %785 = vmatpush1.msra.mxu0 0.0
        %786 = vmatprep.subr.mxu0 0.0
        %787 = vmatpush1.msra.mxu0 0.0
        %788 = vmatprep.subr.mxu0 0.0
        %789 = vmatpush1.msra.mxu0 0.0
        %790 = vmatprep.subr.mxu0 0.0
        %791 = vmatpush1.msra.mxu0 0.0
        %792 = vmatprep.subr.mxu0 0.0
        %793 = vmatpush1.msra.mxu0 0.0
        %794 = vmatprep.subr.mxu0 0.0
        %795 = vmatpush1.msra.mxu0 0.0
        %796 = vmatprep.subr.mxu0 0.0
        %797 = vmatpush1.msra.mxu0 0.0
        %798 = vmatprep.subr.mxu0 0.0
        %799 = vmatpush1.msra.mxu0 0.0
        %800 = vmatprep.subr.mxu0 0.0
        %801 = vmatpush1.msra.mxu0 0.0
        %802 = vmatprep.subr.mxu0 0.0
        %803 = vmatpush1.msra.mxu0 0.0
        %804 = vmatprep.subr.mxu0 0.0
        %805 = vmatpush1.msra.mxu0 0.0
        %806 = vmatprep.subr.mxu0 0.0
        %807 = vmatpush1.msra.mxu0 0.0
        %808 = vmatprep.subr.mxu0 0.0
        %809 = vmatpush1.msra.mxu0 0.0
        %810 = vmatprep.subr.mxu0 0.0
        %811 = vmatpush1.msra.mxu0 0.0
        %812 = vmatprep.subr.mxu0 0.0
        %813 = vmatpush1.msra.mxu0 0.0
        %814 = vmatprep.subr.mxu0 0.0
        %815 = vmatpush1.msra.mxu0 0.0
        %816 = vmatprep.mubr.f32.mxu0 0.0
        %817 = vmatmul.mubr.f32.gmra.mrb[0].mxu0 %v744
        %v818 = vpop.f32.mrb[0].mxu0
        %v819 = vadd.f32 0.0, %v818
        %v820 = vpop.f32.mrb[0].mxu0
        %821 = vmatprep.mubr.f32.mxu0 0.0
        %822 = vmatmul.mubr.f32.gmra.mrb[0].mxu0 %v745
        %v823 = vpop.f32.mrb[0].mxu0
        %v824 = vadd.f32 0.0, %v823
        %v825 = vpop.f32.mrb[0].mxu0
        %826 = vmatprep.mubr.f32.mxu0 0.0
        %827 = vmatmul.mubr.f32.gmra.mrb[0].mxu0 %v746
        %v828 = vpop.f32.mrb[0].mxu0
        %v829 = vadd.f32 0.0, %v828
        %v830 = vpop.f32.mrb[0].mxu0
        %831 = vmatprep.mubr.f32.mxu0 0.0
        %832 = vmatmul.mubr.f32.gmra.mrb[0].mxu0 %v747
        %v833 = vpop.f32.mrb[0].mxu0
        %v834 = vadd.f32 0.0, %v833
        %v835 = vpop.f32.mrb[0].mxu0
        %836 = vmatprep.mubr.f32.mxu0 0.0
        %837 = vmatmul.mubr.f32.gmra.mrb[0].mxu0 %v748
        %v838 = vpop.f32.mrb[0].mxu0
        %v839 = vadd.f32 0.0, %v838
        %v840 = vpop.f32.mrb[0].mxu0
        %841 = vmatprep.mubr.f32.mxu0 0.0
        %842 = vmatmul.mubr.f32.gmra.mrb[0].mxu0 %v749
        %v843 = vpop.f32.mrb[0].mxu0
        %v844 = vadd.f32 0.0, %v843
        %v845 = vpop.f32.mrb[0].mxu0
        %846 = vmatprep.mubr.f32.mxu0 0.0
        %847 = vmatmul.mubr.f32.gmra.mrb[0].mxu0 %v750
        %v848 = vpop.f32.mrb[0].mxu0
        %v849 = vadd.f32 0.0, %v848
        %v850 = vpop.f32.mrb[0].mxu0
        %851 = vmatprep.mubr.f32.mxu0 0.0
        %852 = vmatmul.mubr.f32.gmra.mrb[0].mxu0 %v751
        %v853 = vpop.f32.mrb[0].mxu0
        %v854 = vadd.f32 0.0, %v853
        %v855 = vpop.f32.mrb[0].mxu0
        %856 = vdwg.mxu0
        %v857 = vld [vmem:[%s399] sm:$0xff]
        %v858 = vld [vmem:[%s399 + $0x8] sm:$0xff]
        %v859 = vld [vmem:[%s399 + $0x10] sm:$0xff]
        %v860 = vld [vmem:[%s399 + $0x18] sm:$0xff]
        %v861 = vld [vmem:[%s399 + $0x20] sm:$0xff]
        %v862 = vld [vmem:[%s399 + $0x28] sm:$0xff]
        %v863 = vld [vmem:[%s399 + $0x30] sm:$0xff]
        %v864 = vld [vmem:[%s399 + $0x38] sm:$0xff]
        %865 = vmatprep.subr.mxu0 0.0
        %866 = vmatpush1.msra.mxu0 %v478
        %867 = vmatprep.subr.mxu0 0.0
        %868 = vmatpush1.msra.mxu0 %v479
        %869 = vmatprep.subr.mxu0 0.0
        %870 = vmatpush1.msra.mxu0 %v480
        %871 = vmatprep.subr.mxu0 0.0
        %872 = vmatpush1.msra.mxu0 %v481
        %873 = vmatprep.subr.mxu0 0.0
        %874 = vmatpush1.msra.mxu0 %v482
        %875 = vmatprep.subr.mxu0 0.0
        %876 = vmatpush1.msra.mxu0 %v483
        %877 = vmatprep.subr.mxu0 0.0
        %878 = vmatpush1.msra.mxu0 %v484
        %879 = vmatprep.subr.mxu0 0.0
        %880 = vmatpush1.msra.mxu0 %v485
        %881 = vmatprep.subr.mxu0 0.0
        %882 = vmatpush1.msra.mxu0 %v486
        %883 = vmatprep.subr.mxu0 0.0
        %884 = vmatpush1.msra.mxu0 %v487
        %885 = vmatprep.subr.mxu0 0.0
        %886 = vmatpush1.msra.mxu0 %v488
        %887 = vmatprep.subr.mxu0 0.0
        %888 = vmatpush1.msra.mxu0 %v489
        %889 = vmatprep.subr.mxu0 0.0
        %890 = vmatpush1.msra.mxu0 %v490
        %891 = vmatprep.subr.mxu0 0.0
        %892 = vmatpush1.msra.mxu0 %v491
        %893 = vmatprep.subr.mxu0 0.0
        %894 = vmatpush1.msra.mxu0 %v492
        %895 = vmatprep.subr.mxu0 0.0
        %896 = vmatpush1.msra.mxu0 %v493
        %897 = vmatprep.subr.mxu0 0.0
        %898 = vmatpush1.msra.mxu0 0.0
        %899 = vmatprep.subr.mxu0 0.0
        %900 = vmatpush1.msra.mxu0 0.0
        %901 = vmatprep.subr.mxu0 0.0
        %902 = vmatpush1.msra.mxu0 0.0
        %903 = vmatprep.subr.mxu0 0.0
        %904 = vmatpush1.msra.mxu0 0.0
        %905 = vmatprep.subr.mxu0 0.0
        %906 = vmatpush1.msra.mxu0 0.0
        %907 = vmatprep.subr.mxu0 0.0
        %908 = vmatpush1.msra.mxu0 0.0
        %909 = vmatprep.subr.mxu0 0.0
        %910 = vmatpush1.msra.mxu0 0.0
        %911 = vmatprep.subr.mxu0 0.0
        %912 = vmatpush1.msra.mxu0 0.0
        %913 = vmatprep.subr.mxu0 0.0
        %914 = vmatpush1.msra.mxu0 0.0
        %915 = vmatprep.subr.mxu0 0.0
        %916 = vmatpush1.msra.mxu0 0.0
        %917 = vmatprep.subr.mxu0 0.0
        %918 = vmatpush1.msra.mxu0 0.0
        %919 = vmatprep.subr.mxu0 0.0
        %920 = vmatpush1.msra.mxu0 0.0
        %921 = vmatprep.subr.mxu0 0.0
        %922 = vmatpush1.msra.mxu0 0.0
        %923 = vmatprep.subr.mxu0 0.0
        %924 = vmatpush1.msra.mxu0 0.0
        %925 = vmatprep.subr.mxu0 0.0
        %926 = vmatpush1.msra.mxu0 0.0
        %927 = vmatprep.subr.mxu0 0.0
        %928 = vmatpush1.msra.mxu0 0.0
        %929 = vmatprep.mubr.f32.mxu0 0.0
        %930 = vmatmul.mubr.f32.gmra.mrb[0].mxu0 %v857
        %v931 = vpop.f32.mrb[0].mxu0
        %v932 = vadd.f32 0.0, %v931
        %v933 = vpop.f32.mrb[0].mxu0
        %934 = vmatprep.mubr.f32.mxu0 0.0
        %935 = vmatmul.mubr.f32.gmra.mrb[0].mxu0 %v858
        %v936 = vpop.f32.mrb[0].mxu0
        %v937 = vadd.f32 0.0, %v936
        %v938 = vpop.f32.mrb[0].mxu0
        %939 = vmatprep.mubr.f32.mxu0 0.0
        %940 = vmatmul.mubr.f32.gmra.mrb[0].mxu0 %v859
        %v941 = vpop.f32.mrb[0].mxu0
        %v942 = vadd.f32 0.0, %v941
        %v943 = vpop.f32.mrb[0].mxu0
        %944 = vmatprep.mubr.f32.mxu0 0.0
        %945 = vmatmul.mubr.f32.gmra.mrb[0].mxu0 %v860
        %v946 = vpop.f32.mrb[0].mxu0
        %v947 = vadd.f32 0.0, %v946
        %v948 = vpop.f32.mrb[0].mxu0
        %949 = vmatprep.mubr.f32.mxu0 0.0
        %950 = vmatmul.mubr.f32.gmra.mrb[0].mxu0 %v861
        %v951 = vpop.f32.mrb[0].mxu0
        %v952 = vadd.f32 0.0, %v951
        %v953 = vpop.f32.mrb[0].mxu0
        %954 = vmatprep.mubr.f32.mxu0 0.0
        %955 = vmatmul.mubr.f32.gmra.mrb[0].mxu0 %v862
        %v956 = vpop.f32.mrb[0].mxu0
        %v957 = vadd.f32 0.0, %v956
        %v958 = vpop.f32.mrb[0].mxu0
        %959 = vmatprep.mubr.f32.mxu0 0.0
        %960 = vmatmul.mubr.f32.gmra.mrb[0].mxu0 %v863
        %v961 = vpop.f32.mrb[0].mxu0
        %v962 = vadd.f32 0.0, %v961
        %v963 = vpop.f32.mrb[0].mxu0
        %964 = vmatprep.mubr.f32.mxu0 0.0
        %965 = vmatmul.mubr.f32.gmra.mrb[0].mxu0 %v864
        %v966 = vpop.f32.mrb[0].mxu0
        %v967 = vadd.f32 0.0, %v966
        %v968 = vpop.f32.mrb[0].mxu0
        %969 = vdwg.mxu0
        %970 = vmatprep.subr.mxu0 0.0
        %971 = vmatpush1.msra.mxu0 %v462
        %972 = vmatprep.subr.mxu0 0.0
        %973 = vmatpush1.msra.mxu0 %v463
        %974 = vmatprep.subr.mxu0 0.0
        %975 = vmatpush1.msra.mxu0 %v464
        %976 = vmatprep.subr.mxu0 0.0
        %977 = vmatpush1.msra.mxu0 %v465
        %978 = vmatprep.subr.mxu0 0.0
        %979 = vmatpush1.msra.mxu0 %v466
        %980 = vmatprep.subr.mxu0 0.0
        %981 = vmatpush1.msra.mxu0 %v467
        %982 = vmatprep.subr.mxu0 0.0
        %983 = vmatpush1.msra.mxu0 %v468
        %984 = vmatprep.subr.mxu0 0.0
        %985 = vmatpush1.msra.mxu0 %v469
        %986 = vmatprep.subr.mxu0 0.0
        %987 = vmatpush1.msra.mxu0 %v470
        %988 = vmatprep.subr.mxu0 0.0
        %989 = vmatpush1.msra.mxu0 %v471
        %990 = vmatprep.subr.mxu0 0.0
        %991 = vmatpush1.msra.mxu0 %v472
        %992 = vmatprep.subr.mxu0 0.0
        %993 = vmatpush1.msra.mxu0 %v473
        %994 = vmatprep.subr.mxu0 0.0
        %995 = vmatpush1.msra.mxu0 %v474
        %996 = vmatprep.subr.mxu0 0.0
        %997 = vmatpush1.msra.mxu0 %v475
        %998 = vmatprep.subr.mxu0 0.0
        %999 = vmatpush1.msra.mxu0 %v476
        %1000 = vmatprep.subr.mxu0 0.0
        %1001 = vmatpush1.msra.mxu0 %v477
        %1002 = vmatprep.subr.mxu0 0.0
        %1003 = vmatpush1.msra.mxu0 0.0
        %1004 = vmatprep.subr.mxu0 0.0
        %1005 = vmatpush1.msra.mxu0 0.0
        %1006 = vmatprep.subr.mxu0 0.0
        %1007 = vmatpush1.msra.mxu0 0.0
        %1008 = vmatprep.subr.mxu0 0.0
        %1009 = vmatpush1.msra.mxu0 0.0
        %1010 = vmatprep.subr.mxu0 0.0
        %1011 = vmatpush1.msra.mxu0 0.0
        %1012 = vmatprep.subr.mxu0 0.0
        %1013 = vmatpush1.msra.mxu0 0.0
        %1014 = vmatprep.subr.mxu0 0.0
        %1015 = vmatpush1.msra.mxu0 0.0
        %1016 = vmatprep.subr.mxu0 0.0
        %1017 = vmatpush1.msra.mxu0 0.0
        %1018 = vmatprep.subr.mxu0 0.0
        %1019 = vmatpush1.msra.mxu0 0.0
        %1020 = vmatprep.subr.mxu0 0.0
        %1021 = vmatpush1.msra.mxu0 0.0
        %1022 = vmatprep.subr.mxu0 0.0
        %1023 = vmatpush1.msra.mxu0 0.0
        %1024 = vmatprep.subr.mxu0 0.0
        %1025 = vmatpush1.msra.mxu0 0.0
        %1026 = vmatprep.subr.mxu0 0.0
        %1027 = vmatpush1.msra.mxu0 0.0
        %1028 = vmatprep.subr.mxu0 0.0
        %1029 = vmatpush1.msra.mxu0 0.0
        %1030 = vmatprep.subr.mxu0 0.0
        %1031 = vmatpush1.msra.mxu0 0.0
        %1032 = vmatprep.subr.mxu0 0.0
        %1033 = vmatpush1.msra.mxu0 0.0
        %1034 = vmatprep.mubr.f32.mxu0 0.0
        %1035 = vmatmul.mubr.f32.gmra.mrb[0].mxu0 %v518
        %v1036 = vpop.f32.mrb[0].mxu0
        %v1037 = vadd.f32 %v932, %v1036
        %v1038 = vpop.f32.mrb[0].mxu0
        %1039 = vmatprep.mubr.f32.mxu0 0.0
        %1040 = vmatmul.mubr.f32.gmra.mrb[0].mxu0 %v519
        %v1041 = vpop.f32.mrb[0].mxu0
        %v1042 = vadd.f32 %v937, %v1041
        %v1043 = vpop.f32.mrb[0].mxu0
        %1044 = vmatprep.mubr.f32.mxu0 0.0
        %1045 = vmatmul.mubr.f32.gmra.mrb[0].mxu0 %v520
        %v1046 = vpop.f32.mrb[0].mxu0
        %v1047 = vadd.f32 %v942, %v1046
        %v1048 = vpop.f32.mrb[0].mxu0
        %1049 = vmatprep.mubr.f32.mxu0 0.0
        %1050 = vmatmul.mubr.f32.gmra.mrb[0].mxu0 %v521
        %v1051 = vpop.f32.mrb[0].mxu0
        %v1052 = vadd.f32 %v947, %v1051
        %v1053 = vpop.f32.mrb[0].mxu0
        %1054 = vmatprep.mubr.f32.mxu0 0.0
        %1055 = vmatmul.mubr.f32.gmra.mrb[0].mxu0 %v522
        %v1056 = vpop.f32.mrb[0].mxu0
        %v1057 = vadd.f32 %v952, %v1056
        %v1058 = vpop.f32.mrb[0].mxu0
        %1059 = vmatprep.mubr.f32.mxu0 0.0
        %1060 = vmatmul.mubr.f32.gmra.mrb[0].mxu0 %v523
        %v1061 = vpop.f32.mrb[0].mxu0
        %v1062 = vadd.f32 %v957, %v1061
        %v1063 = vpop.f32.mrb[0].mxu0
        %1064 = vmatprep.mubr.f32.mxu0 0.0
        %1065 = vmatmul.mubr.f32.gmra.mrb[0].mxu0 %v524
        %v1066 = vpop.f32.mrb[0].mxu0
        %v1067 = vadd.f32 %v962, %v1066
        %v1068 = vpop.f32.mrb[0].mxu0
        %1069 = vmatprep.mubr.f32.mxu0 0.0
        %1070 = vmatmul.mubr.f32.gmra.mrb[0].mxu0 %v525
        %v1071 = vpop.f32.mrb[0].mxu0
        %v1072 = vadd.f32 %v967, %v1071
        %v1073 = vpop.f32.mrb[0].mxu0
        %1074 = vdwg.mxu0
        %v1075 = vmax.f32 %v1037, 0.0
        %v1076 = vmax.f32 %v1042, 0.0
        %v1077 = vmax.f32 %v1047, 0.0
        %v1078 = vmax.f32 %v1052, 0.0
        %v1079 = vmax.f32 %v1057, 0.0
        %v1080 = vmax.f32 %v1062, 0.0
        %v1081 = vmax.f32 %v1067, 0.0
        %v1082 = vmax.f32 %v1072, 0.0
        %1083 = vmatprep.subr.mxu0 0.0
        %1084 = vmatpush1.msra.mxu0 %v494
        %1085 = vmatprep.subr.mxu0 0.0
        %1086 = vmatpush1.msra.mxu0 %v495
        %1087 = vmatprep.subr.mxu0 0.0
        %1088 = vmatpush1.msra.mxu0 %v496
        %1089 = vmatprep.subr.mxu0 0.0
        %1090 = vmatpush1.msra.mxu0 %v497
        %1091 = vmatprep.subr.mxu0 0.0
        %1092 = vmatpush1.msra.mxu0 %v498
        %1093 = vmatprep.subr.mxu0 0.0
        %1094 = vmatpush1.msra.mxu0 %v499
        %1095 = vmatprep.subr.mxu0 0.0
        %1096 = vmatpush1.msra.mxu0 %v500
        %1097 = vmatprep.subr.mxu0 0.0
        %1098 = vmatpush1.msra.mxu0 %v501
        %1099 = vmatprep.subr.mxu0 0.0
        %1100 = vmatpush1.msra.mxu0 %v502
        %1101 = vmatprep.subr.mxu0 0.0
        %1102 = vmatpush1.msra.mxu0 %v503
        %1103 = vmatprep.subr.mxu0 0.0
        %1104 = vmatpush1.msra.mxu0 %v504
        %1105 = vmatprep.subr.mxu0 0.0
        %1106 = vmatpush1.msra.mxu0 %v505
        %1107 = vmatprep.subr.mxu0 0.0
        %1108 = vmatpush1.msra.mxu0 %v506
        %1109 = vmatprep.subr.mxu0 0.0
        %1110 = vmatpush1.msra.mxu0 %v507
        %1111 = vmatprep.subr.mxu0 0.0
        %1112 = vmatpush1.msra.mxu0 %v508
        %1113 = vmatprep.subr.mxu0 0.0
        %1114 = vmatpush1.msra.mxu0 %v509
        %1115 = vmatprep.subr.mxu0 0.0
        %1116 = vmatpush1.msra.mxu0 0.0
        %1117 = vmatprep.subr.mxu0 0.0
        %1118 = vmatpush1.msra.mxu0 0.0
        %1119 = vmatprep.subr.mxu0 0.0
        %1120 = vmatpush1.msra.mxu0 0.0
        %1121 = vmatprep.subr.mxu0 0.0
        %1122 = vmatpush1.msra.mxu0 0.0
        %1123 = vmatprep.subr.mxu0 0.0
        %1124 = vmatpush1.msra.mxu0 0.0
        %1125 = vmatprep.subr.mxu0 0.0
        %1126 = vmatpush1.msra.mxu0 0.0
        %1127 = vmatprep.subr.mxu0 0.0
        %1128 = vmatpush1.msra.mxu0 0.0
        %1129 = vmatprep.subr.mxu0 0.0
        %1130 = vmatpush1.msra.mxu0 0.0
        %1131 = vmatprep.subr.mxu0 0.0
        %1132 = vmatpush1.msra.mxu0 0.0
        %1133 = vmatprep.subr.mxu0 0.0
        %1134 = vmatpush1.msra.mxu0 0.0
        %1135 = vmatprep.subr.mxu0 0.0
        %1136 = vmatpush1.msra.mxu0 0.0
        %1137 = vmatprep.subr.mxu0 0.0
        %1138 = vmatpush1.msra.mxu0 0.0
        %1139 = vmatprep.subr.mxu0 0.0
        %1140 = vmatpush1.msra.mxu0 0.0
        %1141 = vmatprep.subr.mxu0 0.0
        %1142 = vmatpush1.msra.mxu0 0.0
        %1143 = vmatprep.subr.mxu0 0.0
        %1144 = vmatpush1.msra.mxu0 0.0
        %1145 = vmatprep.subr.mxu0 0.0
        %1146 = vmatpush1.msra.mxu0 0.0
        %1147 = vmatprep.mubr.f32.mxu0 0.0
        %1148 = vmatmul.mubr.f32.gmra.mrb[0].mxu0 %v1075
        %v1149 = vpop.f32.mrb[0].mxu0
        %v1150 = vadd.f32 0.0, %v1149
        %v1151 = vpop.f32.mrb[0].mxu0
        %1152 = vmatprep.mubr.f32.mxu0 0.0
        %1153 = vmatmul.mubr.f32.gmra.mrb[0].mxu0 %v1076
        %v1154 = vpop.f32.mrb[0].mxu0
        %v1155 = vadd.f32 0.0, %v1154
        %v1156 = vpop.f32.mrb[0].mxu0
        %1157 = vmatprep.mubr.f32.mxu0 0.0
        %1158 = vmatmul.mubr.f32.gmra.mrb[0].mxu0 %v1077
        %v1159 = vpop.f32.mrb[0].mxu0
        %v1160 = vadd.f32 0.0, %v1159
        %v1161 = vpop.f32.mrb[0].mxu0
        %1162 = vmatprep.mubr.f32.mxu0 0.0
        %1163 = vmatmul.mubr.f32.gmra.mrb[0].mxu0 %v1078
        %v1164 = vpop.f32.mrb[0].mxu0
        %v1165 = vadd.f32 0.0, %v1164
        %v1166 = vpop.f32.mrb[0].mxu0
        %1167 = vmatprep.mubr.f32.mxu0 0.0
        %1168 = vmatmul.mubr.f32.gmra.mrb[0].mxu0 %v1079
        %v1169 = vpop.f32.mrb[0].mxu0
        %v1170 = vadd.f32 0.0, %v1169
        %v1171 = vpop.f32.mrb[0].mxu0
        %1172 = vmatprep.mubr.f32.mxu0 0.0
        %1173 = vmatmul.mubr.f32.gmra.mrb[0].mxu0 %v1080
        %v1174 = vpop.f32.mrb[0].mxu0
        %v1175 = vadd.f32 0.0, %v1174
        %v1176 = vpop.f32.mrb[0].mxu0
        %1177 = vmatprep.mubr.f32.mxu0 0.0
        %1178 = vmatmul.mubr.f32.gmra.mrb[0].mxu0 %v1081
        %v1179 = vpop.f32.mrb[0].mxu0
        %v1180 = vadd.f32 0.0, %v1179
        %v1181 = vpop.f32.mrb[0].mxu0
        %1182 = vmatprep.mubr.f32.mxu0 0.0
        %1183 = vmatmul.mubr.f32.gmra.mrb[0].mxu0 %v1082
        %v1184 = vpop.f32.mrb[0].mxu0
        %v1185 = vadd.f32 0.0, %v1184
        %v1186 = vpop.f32.mrb[0].mxu0
        %1187 = vdwg.mxu0
        %v1188 = vsub.f32 %v1150, %v819
        %v1189 = vsub.f32 %v1155, %v824
        %v1190 = vsub.f32 %v1160, %v829
        %v1191 = vsub.f32 %v1165, %v834
        %v1192 = vsub.f32 %v1170, %v839
        %v1193 = vsub.f32 %v1175, %v844
        %v1194 = vsub.f32 %v1180, %v849
        %v1195 = vsub.f32 %v1185, %v854
        %v1196 = vmul.f32 %v1188, 0.499975
        %v1197 = vmul.f32 %v1189, 0.499975
        %v1198 = vmul.f32 %v1190, 0.499975
        %v1199 = vmul.f32 %v1191, 0.499975
        %v1200 = vmul.f32 %v1192, 0.499975
        %v1201 = vmul.f32 %v1193, 0.499975
        %v1202 = vmul.f32 %v1194, 0.499975
        %v1203 = vmul.f32 %v1195, 0.499975
        %v1204 = vmin.f32 %v1196, 80.0
        %v1205 = vmin.f32 %v1197, 80.0
        %v1206 = vmin.f32 %v1198, 80.0
        %v1207 = vmin.f32 %v1199, 80.0
        %v1208 = vmin.f32 %v1200, 80.0
        %v1209 = vmin.f32 %v1201, 80.0
        %v1210 = vmin.f32 %v1202, 80.0
        %v1211 = vmin.f32 %v1203, 80.0
        %v1212 = vmul.f32 %v1204, 1.442695
        %v1213 = vpow.pop %v1212
        %v1214 = vmul.f32 %v1205, 1.442695
        %v1215 = vpow.pop %v1214
        %v1216 = vmul.f32 %v1206, 1.442695
        %v1217 = vpow.pop %v1216
        %v1218 = vmul.f32 %v1207, 1.442695
        %v1219 = vpow.pop %v1218
        %v1220 = vmul.f32 %v1208, 1.442695
        %v1221 = vpow.pop %v1220
        %v1222 = vmul.f32 %v1209, 1.442695
        %v1223 = vpow.pop %v1222
        %v1224 = vmul.f32 %v1210, 1.442695
        %v1225 = vpow.pop %v1224
        %v1226 = vmul.f32 %v1211, 1.442695
        %v1227 = vpow.pop %v1226
        %v1228 = vadd.f32 %v1213, 1.0
        %v1229 = vadd.f32 %v1215, 1.0
        %v1230 = vadd.f32 %v1217, 1.0
        %v1231 = vadd.f32 %v1219, 1.0
        %v1232 = vadd.f32 %v1221, 1.0
        %v1233 = vadd.f32 %v1223, 1.0
        %v1234 = vadd.f32 %v1225, 1.0
        %v1235 = vadd.f32 %v1227, 1.0
        %v1236 = vrcp.pop %v1228
        %v1237 = vmul.f32 1.0, %v1236
        %v1238 = vrcp.pop %v1229
        %v1239 = vmul.f32 1.0, %v1238
        %v1240 = vrcp.pop %v1230
        %v1241 = vmul.f32 1.0, %v1240
        %v1242 = vrcp.pop %v1231
        %v1243 = vmul.f32 1.0, %v1242
        %v1244 = vrcp.pop %v1232
        %v1245 = vmul.f32 1.0, %v1244
        %v1246 = vrcp.pop %v1233
        %v1247 = vmul.f32 1.0, %v1246
        %v1248 = vrcp.pop %v1234
        %v1249 = vmul.f32 1.0, %v1248
        %v1250 = vrcp.pop %v1235
        %v1251 = vmul.f32 1.0, %v1250
        %v1252 = vsub.f32 1.0, %v1237
        %v1253 = vsub.f32 1.0, %v1239
        %v1254 = vsub.f32 1.0, %v1241
        %v1255 = vsub.f32 1.0, %v1243
        %v1256 = vsub.f32 1.0, %v1245
        %v1257 = vsub.f32 1.0, %v1247
        %v1258 = vsub.f32 1.0, %v1249
        %v1259 = vsub.f32 1.0, %v1251
        %v1260 = vmul.f32 %v510, %v1237
        %v1261 = vmul.f32 %v511, %v1239
        %v1262 = vmul.f32 %v512, %v1241
        %v1263 = vmul.f32 %v513, %v1243
        %v1264 = vmul.f32 %v514, %v1245
        %v1265 = vmul.f32 %v515, %v1247
        %v1266 = vmul.f32 %v516, %v1249
        %v1267 = vmul.f32 %v517, %v1251
        %v1268 = vmul.f32 %v518, %v1252
        %v1269 = vmul.f32 %v519, %v1253
        %v1270 = vmul.f32 %v520, %v1254
        %v1271 = vmul.f32 %v521, %v1255
        %v1272 = vmul.f32 %v522, %v1256
        %v1273 = vmul.f32 %v523, %v1257
        %v1274 = vmul.f32 %v524, %v1258
        %v1275 = vmul.f32 %v525, %v1259
        %v1276 = vadd.f32 %v1260, %v1268
        %v1277 = vadd.f32 %v1261, %v1269
        %v1278 = vadd.f32 %v1262, %v1270
        %v1279 = vadd.f32 %v1263, %v1271
        %v1280 = vadd.f32 %v1264, %v1272
        %v1281 = vadd.f32 %v1265, %v1273
        %v1282 = vadd.f32 %v1266, %v1274
        %v1283 = vadd.f32 %v1267, %v1275
        %1284 = vst [vmem:[%s456] sm:$0xff] %v1276
        %1285 = vst [vmem:[%s456 + $0x8] sm:$0xff] %v1277
        %1286 = vst [vmem:[%s456 + $0x10] sm:$0xff] %v1278
        %1287 = vst [vmem:[%s456 + $0x18] sm:$0xff] %v1279
        %1288 = vst [vmem:[%s456 + $0x20] sm:$0xff] %v1280
        %1289 = vst [vmem:[%s456 + $0x28] sm:$0xff] %v1281
        %1290 = vst [vmem:[%s456 + $0x30] sm:$0xff] %v1282
        %1291 = vst [vmem:[%s456 + $0x38] sm:$0xff] %v1283
        %s1292 = sand.u32 %s206, 1
        %s1293 = scalar_lea.sflag [#allocation4], %s1292
        %s1294 = sand.u32 %s206, 1
        %s1295 = smul.addr %s1294, 64
        %s1296 = scalar_lea.vmem [#allocation14], %s1295
        // Predicated region
        $region77: #{tpu_custom_call.1} parent=47 // pred_check
          %p1297 = pneg %p216
        $region78: #{tpu_custom_call.1} parent=47 // pred_check_branch
          %1299 = sbr.rel (%p1297) target = $region80
        $region79: #{tpu_custom_call.1} parent=47 // pred_region
          %s1300 = smul.u32 8, %s31
          %s1302 = ssub.s32 1024, 1024
          %1303 = vsyncadd %s1293, %s1302
          %s1304 = smul.addr %s1300, 128
          %s1305 = scalar_lea.hbm %s7, %s1304
          %s1306 = sshll.u32 %s1296, 4
          %s1307 = int_to_ptr.vmem [resolvable:$true] %s1306
          %1312 = dma.vmem_to_hbm [thread:$0]  %s1307, 1024, %s1305, %s1293, 128, 128, 8
        $region80: #{tpu_custom_call.1} parent=47 // pred_fallthru
          _
      $region48: #{tpu_custom_call.1} parent=5 // pred_fallthru
        _
      %p1313 = scmp.le.s32.totalorder 2, %s26
      // Predicated region
      $region81: #{tpu_custom_call.1} parent=5 // pred_check
        %p1314 = pneg %p1313
      $region82: #{tpu_custom_call.1} parent=5 // pred_check_branch
        %1316 = sbr.rel (%p1314) target = $region84
      $region83: #{tpu_custom_call.1} parent=5 // pred_region
        %s1317 = ssub.s32 %s26, 2
        // Predicated region
        $region85: #{tpu_custom_call.1} parent=83 // pred_check
          %p1318 = pneg %p222
        $region86: #{tpu_custom_call.1} parent=83 // pred_check_branch
          %1320 = sbr.rel (%p1318) target = $region88
        $region87: #{tpu_custom_call.1} parent=83 // pred_region
          %s1321 = sand.u32 %s207, 1
          %s1322 = scalar_lea.sflag [#allocation4], %s1321
          %s1323 = sand.u32 %s207, 1
          %s1324 = smul.addr %s1323, 64
          %s1325 = scalar_lea.vmem [#allocation14], %s1324
          %1326 = dma.done %s1322, 1024
        $region88: #{tpu_custom_call.1} parent=83 // pred_fallthru
          _
      $region84: #{tpu_custom_call.1} parent=5 // pred_fallthru
        _
    $region6: #{tpu_custom_call.1} parent=1 // loop_footer
      %s30 = sadd.s32 1, %s26
    $region7: #{tpu_custom_call.1} parent=1 // loop_footer_branch
      %25 = sbr.rel target = $region3
    $region8: #{tpu_custom_call.1} parent=1 // loop_exit
      _
    %1327 = vsyncpa [#allocation3], 1
    %s1328 = scalar_lea.sflag [#allocation3], 1
    %1329 = vsyncpa %s1328, 1
    %1330 = vsyncpa [#allocation6], 1
    %s1331 = scalar_lea.sflag [#allocation6], 1
    %1332 = vsyncpa %s1331, 1
    %1333 = vsyncpa [#allocation9], 1
    %s1334 = scalar_lea.sflag [#allocation9], 1
    %1335 = vsyncpa %s1334, 1
    %1336 = vsyncpa [#allocation12], 1
    %1337 = vsyncpa [#allocation4], 1
    %s1338 = scalar_lea.sflag [#allocation4], 1
    %1339 = vsyncpa %s1338, 1

</llo_original>
